<compile_context>
chip_gen: v5e
topology: v5e:2x2
jax: 0.10.0
libtpu: 0.0.40
codegen_flags: <defaults>
</compile_context>

<pallas_src>
import jax
import jax.numpy as jnp
from jax.experimental import pallas as pl
from jax.experimental.pallas import tpu as pltpu
import numpy as np

NEG_SLOPE = 0.01  # F.leaky_relu default


def _leaky(v):
    return jnp.where(v >= 0, v, NEG_SLOPE * v)


def conv_up_kernel(x_ref, y_ref, l0_ref, l1_ref, b1_ref,
                   g0_ref, g1_ref, g2_ref, b2_ref, o_ref):
    f32 = jnp.float32
    W = x_ref.shape[2]      # lo-res width
    W2 = o_ref.shape[2]     # hi-res width

    # ---- loop-invariant 0/1 structure matrices (iota-built, stay in registers) ----
    # column scatter for the stride-2 interleave: E_kj[j, q] = (q == 2j + kj)
    jj = jax.lax.broadcasted_iota(jnp.int32, (W, W2), 0)
    qq = jax.lax.broadcasted_iota(jnp.int32, (W, W2), 1)
    E0 = (qq == 2 * jj).astype(f32)
    E1 = (qq == 2 * jj + 1).astype(f32)
    # zero-padded column shift for the 3x3 halo: C_dj[q, j] = (q == j + dj - 1)
    q2 = jax.lax.broadcasted_iota(jnp.int32, (W2, W2), 0)
    j2 = jax.lax.broadcasted_iota(jnp.int32, (W2, W2), 1)
    C0 = (q2 == j2 - 1).astype(f32)
    C1 = (q2 == j2).astype(f32)
    C2 = (q2 == j2 + 1).astype(f32)

    # ---- stage 1: ConvTranspose2d(k=2,s=2) + bias + leaky + residual (MXU) --------
    X = x_ref[0]                                                        # (Cin*H, W)
    U0 = jnp.dot(X, E0, preferred_element_type=f32)                     # (Cin*H, W2)
    U1 = jnp.dot(X, E1, preferred_element_type=f32)
    zraw = (jnp.dot(l0_ref[...], U0, preferred_element_type=f32)
            + jnp.dot(l1_ref[...], U1, preferred_element_type=f32))     # (Co*H2, W2)
    z = _leaky(zraw + b1_ref[...]) + y_ref[0]

    # ---- stage 2: depthwise 3x3 + pointwise 1x1 fused into 3 column shifts
    #               and 3 block-banded left matmuls ------------------------------
    V0 = jnp.dot(z, C0, preferred_element_type=f32)                     # z cols -1
    V1 = jnp.dot(z, C1, preferred_element_type=f32)                     # z cols  0
    V2 = jnp.dot(z, C2, preferred_element_type=f32)                     # z cols +1
    opre = (jnp.dot(g0_ref[...], V0, preferred_element_type=f32)
            + jnp.dot(g1_ref[...], V1, preferred_element_type=f32)
            + jnp.dot(g2_ref[...], V2, preferred_element_type=f32))
    o_ref[0] = _leaky(opre + b2_ref[...])


@jax.jit
def conv_up(x, y, w1, b1, wd, wp, bp):
    """x: (N, Cin, H, W), y: (N, Cin//2, 2H, 2W) -> (N, Cin//2, 2H, 2W), NCHW."""
    N, Cin, H, W = x.shape
    Co = Cin // 2
    H2, W2 = 2 * H, 2 * W
    assert y.shape == (N, Co, H2, W2)
    f32 = jnp.float32

    x = x.astype(f32); y = y.astype(f32)
    w1 = w1.astype(f32); b1 = b1.astype(f32)
    wd = wd.astype(f32); wp = wp.astype(f32); bp = bp.astype(f32)

    # ---- weight-only precompute (tiny, one-time per call) -------------------------
    # L_kj[co*H2 + r, c*H + i] = w1[c, co, r%2, kj] * (i == r//2)
    r = jnp.arange(H2)
    sel = (jnp.arange(H)[None, :] == (r // 2)[:, None]).astype(f32)      # (H2, H)

    def build_L(kj):
        wk = w1[:, :, :, kj][:, :, r % 2]                   # (Cin, Co, H2)
        wk = jnp.transpose(wk, (1, 2, 0))                   # (Co, H2, Cin)
        Lk = wk[:, :, :, None] * sel[None, :, None, :]      # (Co, H2, Cin, H)
        return Lk.reshape(Co * H2, Cin * H)

    L0, L1 = build_L(0), build_L(1)

    # G_dj[o*H2 + i, c*H2 + s] = wp[o, c] * wd[c, 0, s-i+1, dj]  for |s-i| <= 1
    idx = jnp.arange(H2)
    diff = idx[None, :] - idx[:, None]                      # diff[i, s] = s - i
    bands = [(diff == d).astype(f32) for d in (-1, 0, 1)]   # di = 0, 1, 2
    pw2 = wp[:, :, 0, 0]                                     # (Co, Co)

    def build_G(dj):
        K = sum(wd[:, 0, di, dj][:, None, None] * bands[di] for di in range(3))  # (Co,H2,H2)
        G = pw2[:, :, None, None] * K[None, :, :, :]        # (o, c, i, s)
        return jnp.transpose(G, (0, 2, 1, 3)).reshape(Co * H2, Co * H2)

    G0, G1, G2 = build_G(0), build_G(1), build_G(2)

    b1col = jnp.repeat(b1, H2)[:, None]                     # (Co*H2, 1)
    b2col = jnp.repeat(bp, H2)[:, None]

    # free, contiguous reshapes — NCHW memory layout is untouched
    xs = x.reshape(N, Cin * H, W)
    ys = y.reshape(N, Co * H2, W2)

    out = pl.pallas_call(
        conv_up_kernel,
        out_shape=jax.ShapeDtypeStruct((N, Co * H2, W2), f32),
        grid=(N,),
        in_specs=[
            pl.BlockSpec((1, Cin * H, W), lambda n: (n, 0, 0)),
            pl.BlockSpec((1, Co * H2, W2), lambda n: (n, 0, 0)),
            pl.BlockSpec((Co * H2, Cin * H), lambda n: (0, 0)),
            pl.BlockSpec((Co * H2, Cin * H), lambda n: (0, 0)),
            pl.BlockSpec((Co * H2, 1), lambda n: (0, 0)),
            pl.BlockSpec((Co * H2, Co * H2), lambda n: (0, 0)),
            pl.BlockSpec((Co * H2, Co * H2), lambda n: (0, 0)),
            pl.BlockSpec((Co * H2, Co * H2), lambda n: (0, 0)),
            pl.BlockSpec((Co * H2, 1), lambda n: (0, 0)),
        ],
        out_specs=pl.BlockSpec((1, Co * H2, W2), lambda n: (n, 0, 0)),
        compiler_params=pltpu.CompilerParams(
            dimension_semantics=("parallel",),
            vmem_limit_bytes=32 * 1024 * 1024,
        ),
    )(xs, ys, L0, L1, b1col, G0, G1, G2, b2col)
    return out.reshape(N, Co, H2, W2)


# ---------------------------------------------------------------------------
# Pure-JAX reference (mirrors the PyTorch math) for verification.
# ---------------------------------------------------------------------------
def reference(x, y, w1, b1, wd, wp, bp):
    N, Cin, H, W = x.shape
    Co = Cin // 2
    t = jnp.einsum('ncij,cokl->noikjl', x, w1)          # out[n,o,2i+k,2j+l]
    up = t.reshape(N, Co, 2 * H, 2 * W) + b1[None, :, None, None]
    up = _leaky(up)
    z = up + y
    zp = jnp.pad(z, ((0, 0), (0, 0), (1, 1), (1, 1)))
    dwv = jnp.zeros_like(z)
    for di in range(3):
        for dj in range(3):
            dwv = dwv + zp[:, :, di:di + 2 * H, dj:dj + 2 * W] * \
                wd[None, :, 0, di, dj][..., None, None]
    out = jnp.einsum('nchw,oc->nohw', dwv, wp[:, :, 0, 0]) + bp[None, :, None, None]
    return _leaky(out)


if __name__ == "__main__":
    N, Cin, H, W = 2, 8, 16, 16
    Co = Cin // 2

    key = jax.random.PRNGKey(0)
    k = jax.random.split(key, 7)
    x = jax.random.normal(k[0], (N, Cin, H, W), jnp.float32)
    y = jax.random.normal(k[1], (N, Co, 2 * H, 2 * W), jnp.float32)
    w1 = jax.random.normal(k[2], (Cin, Co, 2, 2), jnp.float32) * 0.2   # ConvTranspose2d weight
    b1 = jax.random.normal(k[3], (Co,), jnp.float32) * 0.1
    wd = jax.random.normal(k[4], (Co, 1, 3, 3), jnp.float32) * 0.2     # depthwise weight (no bias)
    wp = jax.random.normal(k[5], (Co, Co, 1, 1), jnp.float32) * 0.2    # pointwise weight
    bp = jax.random.normal(k[6], (Co,), jnp.float32) * 0.1

    out = jax.block_until_ready(conv_up(x, y, w1, b1, wd, wp, bp))
    ref = jax.block_until_ready(reference(x, y, w1, b1, wd, wp, bp))

    np.testing.assert_allclose(np.asarray(out), np.asarray(ref), rtol=1e-4, atol=1e-4)
    print("KERNEL_OK")
</pallas_src>

<mosaic_0001>
module attributes {stable_mosaic.version = 11 : i64} {
  func.func @conv_up_kernel(%arg0: i32, %arg1: memref<1x128x16xf32, #tpu.memory_space<vmem>>, %arg2: memref<1x128x32xf32, #tpu.memory_space<vmem>>, %arg3: memref<128x128xf32, #tpu.memory_space<vmem>>, %arg4: memref<128x128xf32, #tpu.memory_space<vmem>>, %arg5: memref<128x1xf32, #tpu.memory_space<vmem>>, %arg6: memref<128x128xf32, #tpu.memory_space<vmem>>, %arg7: memref<128x128xf32, #tpu.memory_space<vmem>>, %arg8: memref<128x128xf32, #tpu.memory_space<vmem>>, %arg9: memref<128x1xf32, #tpu.memory_space<vmem>>, %arg10: memref<1x128x32xf32, #tpu.memory_space<vmem>>) attributes {dimension_semantics = [#tpu.dimension_semantics<parallel>], iteration_bounds = array<i64: 2>, scalar_prefetch = 0 : i64, scratch_operands = 0 : i64, tpu.core_type = #tpu.core_type<tc>, window_params = [{transform_indices = @transform_0, window_bounds = array<i64: 1, 128, 16>}, {transform_indices = @transform_1, window_bounds = array<i64: 1, 128, 32>}, {pipeline_mode = #tpu.pipeline_mode<synchronous>, transform_indices = @transform_2, window_bounds = array<i64: 128, 128>}, {pipeline_mode = #tpu.pipeline_mode<synchronous>, transform_indices = @transform_3, window_bounds = array<i64: 128, 128>}, {pipeline_mode = #tpu.pipeline_mode<synchronous>, transform_indices = @transform_4, window_bounds = array<i64: 128, 1>}, {pipeline_mode = #tpu.pipeline_mode<synchronous>, transform_indices = @transform_5, window_bounds = array<i64: 128, 128>}, {pipeline_mode = #tpu.pipeline_mode<synchronous>, transform_indices = @transform_6, window_bounds = array<i64: 128, 128>}, {pipeline_mode = #tpu.pipeline_mode<synchronous>, transform_indices = @transform_7, window_bounds = array<i64: 128, 128>}, {pipeline_mode = #tpu.pipeline_mode<synchronous>, transform_indices = @transform_8, window_bounds = array<i64: 128, 1>}, {transform_indices = @transform_9, window_bounds = array<i64: 1, 128, 32>}]} {
    %0 = tpu.iota {dimensions = array<i32: 0>} : vector<16x32xi32>
    %1 = tpu.iota {dimensions = array<i32: 1>} : vector<16x32xi32>
    %c2_i32 = arith.constant 2 : i32
    %2 = vector.broadcast %c2_i32 : i32 to vector<16x32xi32>
    %3 = arith.muli %2, %0 : vector<16x32xi32>
    %4 = arith.cmpi eq, %1, %3 : vector<16x32xi32>
    %5 = arith.extui %4 : vector<16x32xi1> to vector<16x32xi32>
    %6 = arith.sitofp %5 : vector<16x32xi32> to vector<16x32xf32>
    %c2_i32_0 = arith.constant 2 : i32
    %7 = vector.broadcast %c2_i32_0 : i32 to vector<16x32xi32>
    %8 = arith.muli %7, %0 : vector<16x32xi32>
    %c1_i32 = arith.constant 1 : i32
    %9 = vector.broadcast %c1_i32 : i32 to vector<16x32xi32>
    %10 = arith.addi %8, %9 : vector<16x32xi32>
    %11 = arith.cmpi eq, %1, %10 : vector<16x32xi32>
    %12 = arith.extui %11 : vector<16x32xi1> to vector<16x32xi32>
    %13 = arith.sitofp %12 : vector<16x32xi32> to vector<16x32xf32>
    %14 = tpu.iota {dimensions = array<i32: 0>} : vector<32x32xi32>
    %15 = tpu.iota {dimensions = array<i32: 1>} : vector<32x32xi32>
    %c1_i32_1 = arith.constant 1 : i32
    %16 = vector.broadcast %c1_i32_1 : i32 to vector<32x32xi32>
    %17 = arith.subi %15, %16 : vector<32x32xi32>
    %18 = arith.cmpi eq, %14, %17 : vector<32x32xi32>
    %19 = arith.extui %18 : vector<32x32xi1> to vector<32x32xi32>
    %20 = arith.sitofp %19 : vector<32x32xi32> to vector<32x32xf32>
    %21 = arith.cmpi eq, %14, %15 : vector<32x32xi32>
    %22 = arith.extui %21 : vector<32x32xi1> to vector<32x32xi32>
    %23 = arith.sitofp %22 : vector<32x32xi32> to vector<32x32xf32>
    %c1_i32_2 = arith.constant 1 : i32
    %24 = vector.broadcast %c1_i32_2 : i32 to vector<32x32xi32>
    %25 = arith.addi %15, %24 : vector<32x32xi32>
    %26 = arith.cmpi eq, %14, %25 : vector<32x32xi32>
    %27 = arith.extui %26 : vector<32x32xi1> to vector<32x32xi32>
    %28 = arith.sitofp %27 : vector<32x32xi32> to vector<32x32xf32>
    %c0 = arith.constant 0 : index
    %c0_3 = arith.constant 0 : index
    %c0_4 = arith.constant 0 : index
    %29 = vector.load %arg1[%c0, %c0_3, %c0_4] : memref<1x128x16xf32, #tpu.memory_space<vmem>>, vector<1x128x16xf32>
    %30 = vector.shape_cast %29 : vector<1x128x16xf32> to vector<128x16xf32>
    %cst = arith.constant dense<0.000000e+00> : vector<128x32xf32>
    %31 = tpu.matmul %30, %6, %cst {dimension_numbers = #tpu.dot_dimension_numbers<[1], [0], [0], [1], [0, 0, 1, 1], [], []>} : vector<128x16xf32>, vector<16x32xf32>, vector<128x32xf32> -> vector<128x32xf32>
    %cst_5 = arith.constant dense<0.000000e+00> : vector<128x32xf32>
    %32 = tpu.matmul %30, %13, %cst_5 {dimension_numbers = #tpu.dot_dimension_numbers<[1], [0], [0], [1], [0, 0, 1, 1], [], []>} : vector<128x16xf32>, vector<16x32xf32>, vector<128x32xf32> -> vector<128x32xf32>
    %c0_6 = arith.constant 0 : index
    %c0_7 = arith.constant 0 : index
    %33 = vector.load %arg3[%c0_6, %c0_7] : memref<128x128xf32, #tpu.memory_space<vmem>>, vector<128x128xf32>
    %cst_8 = arith.constant dense<0.000000e+00> : vector<128x32xf32>
    %34 = tpu.matmul %33, %31, %cst_8 {dimension_numbers = #tpu.dot_dimension_numbers<[1], [0], [0], [1], [0, 0, 1, 1], [], []>} : vector<128x128xf32>, vector<128x32xf32>, vector<128x32xf32> -> vector<128x32xf32>
    %c0_9 = arith.constant 0 : index
    %c0_10 = arith.constant 0 : index
    %35 = vector.load %arg4[%c0_9, %c0_10] : memref<128x128xf32, #tpu.memory_space<vmem>>, vector<128x128xf32>
    %cst_11 = arith.constant dense<0.000000e+00> : vector<128x32xf32>
    %36 = tpu.matmul %35, %32, %cst_11 {dimension_numbers = #tpu.dot_dimension_numbers<[1], [0], [0], [1], [0, 0, 1, 1], [], []>} : vector<128x128xf32>, vector<128x32xf32>, vector<128x32xf32> -> vector<128x32xf32>
    %37 = arith.addf %34, %36 : vector<128x32xf32>
    %c0_12 = arith.constant 0 : index
    %c0_13 = arith.constant 0 : index
    %38 = vector.load %arg5[%c0_12, %c0_13] : memref<128x1xf32, #tpu.memory_space<vmem>>, vector<128x1xf32>
    %39 = vector.broadcast %38 : vector<128x1xf32> to vector<128x32xf32>
    %40 = arith.addf %37, %39 : vector<128x32xf32>
    %cst_14 = arith.constant 0.000000e+00 : f32
    %41 = vector.broadcast %cst_14 : f32 to vector<128x32xf32>
    %42 = arith.cmpf oge, %40, %41 : vector<128x32xf32>
    %cst_15 = arith.constant 0.00999999977 : f32
    %43 = vector.broadcast %cst_15 : f32 to vector<128x32xf32>
    %44 = arith.mulf %43, %40 : vector<128x32xf32>
    %45 = arith.select %42, %40, %44 : vector<128x32xi1>, vector<128x32xf32>
    %c0_16 = arith.constant 0 : index
    %c0_17 = arith.constant 0 : index
    %c0_18 = arith.constant 0 : index
    %46 = vector.load %arg2[%c0_16, %c0_17, %c0_18] : memref<1x128x32xf32, #tpu.memory_space<vmem>>, vector<1x128x32xf32>
    %47 = vector.shape_cast %46 : vector<1x128x32xf32> to vector<128x32xf32>
    %48 = arith.addf %45, %47 : vector<128x32xf32>
    %cst_19 = arith.constant dense<0.000000e+00> : vector<128x32xf32>
    %49 = tpu.matmul %48, %20, %cst_19 {dimension_numbers = #tpu.dot_dimension_numbers<[1], [0], [0], [1], [0, 0, 1, 1], [], []>} : vector<128x32xf32>, vector<32x32xf32>, vector<128x32xf32> -> vector<128x32xf32>
    %cst_20 = arith.constant dense<0.000000e+00> : vector<128x32xf32>
    %50 = tpu.matmul %48, %23, %cst_20 {dimension_numbers = #tpu.dot_dimension_numbers<[1], [0], [0], [1], [0, 0, 1, 1], [], []>} : vector<128x32xf32>, vector<32x32xf32>, vector<128x32xf32> -> vector<128x32xf32>
    %cst_21 = arith.constant dense<0.000000e+00> : vector<128x32xf32>
    %51 = tpu.matmul %48, %28, %cst_21 {dimension_numbers = #tpu.dot_dimension_numbers<[1], [0], [0], [1], [0, 0, 1, 1], [], []>} : vector<128x32xf32>, vector<32x32xf32>, vector<128x32xf32> -> vector<128x32xf32>
    %c0_22 = arith.constant 0 : index
    %c0_23 = arith.constant 0 : index
    %52 = vector.load %arg6[%c0_22, %c0_23] : memref<128x128xf32, #tpu.memory_space<vmem>>, vector<128x128xf32>
    %cst_24 = arith.constant dense<0.000000e+00> : vector<128x32xf32>
    %53 = tpu.matmul %52, %49, %cst_24 {dimension_numbers = #tpu.dot_dimension_numbers<[1], [0], [0], [1], [0, 0, 1, 1], [], []>} : vector<128x128xf32>, vector<128x32xf32>, vector<128x32xf32> -> vector<128x32xf32>
    %c0_25 = arith.constant 0 : index
    %c0_26 = arith.constant 0 : index
    %54 = vector.load %arg7[%c0_25, %c0_26] : memref<128x128xf32, #tpu.memory_space<vmem>>, vector<128x128xf32>
    %cst_27 = arith.constant dense<0.000000e+00> : vector<128x32xf32>
    %55 = tpu.matmul %54, %50, %cst_27 {dimension_numbers = #tpu.dot_dimension_numbers<[1], [0], [0], [1], [0, 0, 1, 1], [], []>} : vector<128x128xf32>, vector<128x32xf32>, vector<128x32xf32> -> vector<128x32xf32>
    %56 = arith.addf %53, %55 : vector<128x32xf32>
    %c0_28 = arith.constant 0 : index
    %c0_29 = arith.constant 0 : index
    %57 = vector.load %arg8[%c0_28, %c0_29] : memref<128x128xf32, #tpu.memory_space<vmem>>, vector<128x128xf32>
    %cst_30 = arith.constant dense<0.000000e+00> : vector<128x32xf32>
    %58 = tpu.matmul %57, %51, %cst_30 {dimension_numbers = #tpu.dot_dimension_numbers<[1], [0], [0], [1], [0, 0, 1, 1], [], []>} : vector<128x128xf32>, vector<128x32xf32>, vector<128x32xf32> -> vector<128x32xf32>
    %59 = arith.addf %56, %58 : vector<128x32xf32>
    %c0_31 = arith.constant 0 : index
    %c0_32 = arith.constant 0 : index
    %60 = vector.load %arg9[%c0_31, %c0_32] : memref<128x1xf32, #tpu.memory_space<vmem>>, vector<128x1xf32>
    %61 = vector.broadcast %60 : vector<128x1xf32> to vector<128x32xf32>
    %62 = arith.addf %59, %61 : vector<128x32xf32>
    %cst_33 = arith.constant 0.000000e+00 : f32
    %63 = vector.broadcast %cst_33 : f32 to vector<128x32xf32>
    %64 = arith.cmpf oge, %62, %63 : vector<128x32xf32>
    %cst_34 = arith.constant 0.00999999977 : f32
    %65 = vector.broadcast %cst_34 : f32 to vector<128x32xf32>
    %66 = arith.mulf %65, %62 : vector<128x32xf32>
    %67 = arith.select %64, %62, %66 : vector<128x32xi1>, vector<128x32xf32>
    %c0_35 = arith.constant 0 : index
    %c0_36 = arith.constant 0 : index
    %c0_37 = arith.constant 0 : index
    %68 = vector.load %arg10[%c0_35, %c0_36, %c0_37] : memref<1x128x32xf32, #tpu.memory_space<vmem>>, vector<1x128x32xf32>
    %69 = vector.shape_cast %68 : vector<1x128x32xf32> to vector<128x32xf32>
    %70 = vector.shape_cast %67 : vector<128x32xf32> to vector<1x128x32xf32>
    tpu.vector_store %arg10[%c0_35, %c0_36, %c0_37], %70 {strides = array<i32>} : memref<1x128x32xf32, #tpu.memory_space<vmem>>, vector<1x128x32xf32>,
    return
  }
  func.func @transform_0(%arg0: i32) -> (i32, i32, i32) {
    %c0_i32 = arith.constant 0 : i32
    %c0_i32_0 = arith.constant 0 : i32
    %c0_i32_1 = arith.constant 0 : i32
    return %arg0, %c0_i32, %c0_i32_0 : i32, i32, i32
  }
  func.func @transform_1(%arg0: i32) -> (i32, i32, i32) {
    %c0_i32 = arith.constant 0 : i32
    %c0_i32_0 = arith.constant 0 : i32
    %c0_i32_1 = arith.constant 0 : i32
    return %arg0, %c0_i32, %c0_i32_0 : i32, i32, i32
  }
  func.func @transform_2(%arg0: i32) -> (i32, i32) {
    %c0_i32 = arith.constant 0 : i32
    %c0_i32_0 = arith.constant 0 : i32
    %c0_i32_1 = arith.constant 0 : i32
    return %c0_i32, %c0_i32_0 : i32, i32
  }
  func.func @transform_3(%arg0: i32) -> (i32, i32) {
    %c0_i32 = arith.constant 0 : i32
    %c0_i32_0 = arith.constant 0 : i32
    %c0_i32_1 = arith.constant 0 : i32
    return %c0_i32, %c0_i32_0 : i32, i32
  }
  func.func @transform_4(%arg0: i32) -> (i32, i32) {
    %c0_i32 = arith.constant 0 : i32
    %c0_i32_0 = arith.constant 0 : i32
    %c0_i32_1 = arith.constant 0 : i32
    return %c0_i32, %c0_i32_0 : i32, i32
  }
  func.func @transform_5(%arg0: i32) -> (i32, i32) {
    %c0_i32 = arith.constant 0 : i32
    %c0_i32_0 = arith.constant 0 : i32
    %c0_i32_1 = arith.constant 0 : i32
    return %c0_i32, %c0_i32_0 : i32, i32
  }
  func.func @transform_6(%arg0: i32) -> (i32, i32) {
    %c0_i32 = arith.constant 0 : i32
    %c0_i32_0 = arith.constant 0 : i32
    %c0_i32_1 = arith.constant 0 : i32
    return %c0_i32, %c0_i32_0 : i32, i32
  }
  func.func @transform_7(%arg0: i32) -> (i32, i32) {
    %c0_i32 = arith.constant 0 : i32
    %c0_i32_0 = arith.constant 0 : i32
    %c0_i32_1 = arith.constant 0 : i32
    return %c0_i32, %c0_i32_0 : i32, i32
  }
  func.func @transform_8(%arg0: i32) -> (i32, i32) {
    %c0_i32 = arith.constant 0 : i32
    %c0_i32_0 = arith.constant 0 : i32
    %c0_i32_1 = arith.constant 0 : i32
    return %c0_i32, %c0_i32_0 : i32, i32
  }
  func.func @transform_9(%arg0: i32) -> (i32, i32, i32) {
    %c0_i32 = arith.constant 0 : i32
    %c0_i32_0 = arith.constant 0 : i32
    %c0_i32_1 = arith.constant 0 : i32
    return %arg0, %c0_i32, %c0_i32_0 : i32, i32, i32
  }
}

</mosaic_0001>

<llo_original>
// kernel: conv_up.1
$region0: #{conv_up.1}
  #allocation0 [shape = 'u32[]', space=smem, size = 0x4, offset = 0x4, fixed_abs, tag = 'smem constant byte address 0x4 - core index']
  #allocation1 [shape = 'u32[72,128]{1,0:T(1,128)}', space=vmem, size = 0x9000, scoped, tag = 'internal scratch']
  %s0 = inlined_call_operand.vmem [shape: f32[2,128,16], index: 0, kind: input, shape index: {}]
  %s1 = inlined_call_operand.vmem [shape: f32[2,128,32], index: 1, kind: input, shape index: {}]
  %s2 = inlined_call_operand.vmem [shape: f32[128,128], index: 2, kind: input, shape index: {}]
  %s3 = inlined_call_operand.vmem [shape: f32[128,128], index: 3, kind: input, shape index: {}]
  %s4 = inlined_call_operand.vmem [shape: f32[128,1], index: 4, kind: input, shape index: {}]
  %s5 = inlined_call_operand.vmem [shape: f32[128,128], index: 5, kind: input, shape index: {}]
  %s6 = inlined_call_operand.vmem [shape: f32[128,128], index: 6, kind: input, shape index: {}]
  %s7 = inlined_call_operand.vmem [shape: f32[128,128], index: 7, kind: input, shape index: {}]
  %s8 = inlined_call_operand.vmem [shape: f32[128,1], index: 8, kind: input, shape index: {}]
  %s9 = inlined_call_operand.hbm [shape: f32[2,128,32], index: 9, kind: output, shape index: {}]
  %s10 = sld [smem:[#allocation0]]
  $region69: #{conv_up.1} parent=0
    _
  %s12 = ssub.s32 1, %s10
  %s13 = scalar_select 0, %s12, %s10
  $region1: #{conv_up.1} parent=0
    #allocation2 [shape = 'u8[131072]{0}', space=vmem, size = 0x20000, scoped, tag = 'output window, operand 0']
    #allocation3 [shape = 's32[2]{0}', space=sflag, size = 0x8, scoped, tag = 'scoped memory for conv_up.1']
    %14 = vsyncpa [#allocation3], 0
    %s15 = scalar_lea.sflag [#allocation3], 1
    %16 = vsyncpa %s15, 0
    loop: start=0, step=1, limit=4
    $region2: #{conv_up.1} parent=1 // loop_pre_header
      _
    $region3: #{conv_up.1} parent=1 // loop_header
      %s18 = sphi 0, %s22
      %p19 = scmp.ge.s32.totalorder %s18, 4
      %s28 = sphi 0, %s30
      %s31 = sphi 0, %s28
      %s32 = sphi 0, %s31
      %s48 = sphi 0, %s32
      %s54 = sphi 0, %s56
      %s57 = sphi 0, %s54
      %s58 = sphi 0, %s57
      %s74 = sphi 0, %s58
      %s78 = sphi 0, %s78
      %s80 = sphi 0, %s78
      %s81 = sphi 0, %s80
      %s95 = sphi 0, %s81
      %s99 = sphi 0, %s99
      %s101 = sphi 0, %s99
      %s102 = sphi 0, %s101
      %s116 = sphi 0, %s102
      %s120 = sphi 0, %s120
      %s122 = sphi 0, %s120
      %s123 = sphi 0, %s122
      %s137 = sphi 0, %s123
      %s141 = sphi 0, %s141
      %s143 = sphi 0, %s141
      %s144 = sphi 0, %s143
      %s158 = sphi 0, %s144
      %s162 = sphi 0, %s162
      %s164 = sphi 0, %s162
      %s165 = sphi 0, %s164
      %s179 = sphi 0, %s165
      %s183 = sphi 0, %s183
      %s185 = sphi 0, %s183
      %s186 = sphi 0, %s185
      %s200 = sphi 0, %s186
      %s204 = sphi 0, %s204
      %s206 = sphi 0, %s204
      %s207 = sphi 0, %s206
      %s221 = sphi 0, %s207
      %s227 = sphi 0, %s229
      %s230 = sphi 0, %s227
      %s231 = sphi 0, %s230
      %s247 = sphi 0, %s231
    $region4: #{conv_up.1} parent=1 // loop_header_branch
      %21 = sbr.rel (%p19) target = $region8
    $region5: #{conv_up.1} parent=1 // loop_body
      %s23 = ssub.s32 %s18, 1
      %s24 = ssub.s32 %s18, 2
      %s25 = sadd.s32 %s18, 1
      %s26 = ssub.s32 %s18, %s25
      %p27 = scmp.eq.s32.totalorder %s26, 0
      %s29 = sadd.s32 %s28, 1
      %s30 = scalar_select %p27, %s28, %s29
      %p33 = pneg %p27
      %p34 = scmp.eq.s32.totalorder %s18, 1
      %p35 = por %p33, %p34
      %p36 = scmp.ne.s32.totalorder %s28, %s31
      %p37 = scmp.eq.s32.totalorder %s18, 0
      %p38 = por %p36, %p37
      %p39 = scmp.ne.s32.totalorder %s28, %s31
      %p40 = scmp.eq.s32.totalorder %s23, 1
      %p41 = por %p39, %p40
      %p42 = scmp.ne.s32.totalorder %s31, %s32
      %p43 = scmp.eq.s32.totalorder %s23, 0
      %p44 = por %p42, %p43
      %p45 = scmp.ne.s32.totalorder %s31, %s32
      %p46 = scmp.eq.s32.totalorder %s24, 1
      %p47 = por %p45, %p46
      %p49 = scmp.ne.s32.totalorder %s32, %s48
      %p50 = scmp.eq.s32.totalorder %s24, 0
      %p51 = por %p49, %p50
      %s52 = ssub.s32 %s18, %s25
      %p53 = scmp.eq.s32.totalorder %s52, 0
      %s55 = sadd.s32 %s54, 1
      %s56 = scalar_select %p53, %s54, %s55
      %p59 = pneg %p53
      %p60 = scmp.eq.s32.totalorder %s18, 1
      %p61 = por %p59, %p60
      %p62 = scmp.ne.s32.totalorder %s54, %s57
      %p63 = scmp.eq.s32.totalorder %s18, 0
      %p64 = por %p62, %p63
      %p65 = scmp.ne.s32.totalorder %s54, %s57
      %p66 = scmp.eq.s32.totalorder %s23, 1
      %p67 = por %p65, %p66
      %p68 = scmp.ne.s32.totalorder %s57, %s58
      %p69 = scmp.eq.s32.totalorder %s23, 0
      %p70 = por %p68, %p69
      %p71 = scmp.ne.s32.totalorder %s57, %s58
      %p72 = scmp.eq.s32.totalorder %s24, 1
      %p73 = por %p71, %p72
      %p75 = scmp.ne.s32.totalorder %s58, %s74
      %p76 = scmp.eq.s32.totalorder %s24, 0
      %p77 = por %p75, %p76
      %s79 = sadd.s32 %s78, 1
      %p82 = scmp.eq.s32.totalorder %s18, 1
      %p83 = scmp.ne.s32.totalorder %s78, %s80
      %p84 = scmp.eq.s32.totalorder %s18, 0
      %p85 = por %p83, %p84
      %p86 = scmp.ne.s32.totalorder %s78, %s80
      %p87 = scmp.eq.s32.totalorder %s23, 1
      %p88 = por %p86, %p87
      %p89 = scmp.ne.s32.totalorder %s80, %s81
      %p90 = scmp.eq.s32.totalorder %s23, 0
      %p91 = por %p89, %p90
      %p92 = scmp.ne.s32.totalorder %s80, %s81
      %p93 = scmp.eq.s32.totalorder %s24, 1
      %p94 = por %p92, %p93
      %p96 = scmp.ne.s32.totalorder %s81, %s95
      %p97 = scmp.eq.s32.totalorder %s24, 0
      %p98 = por %p96, %p97
      %s100 = sadd.s32 %s99, 1
      %p103 = scmp.eq.s32.totalorder %s18, 1
      %p104 = scmp.ne.s32.totalorder %s99, %s101
      %p105 = scmp.eq.s32.totalorder %s18, 0
      %p106 = por %p104, %p105
      %p107 = scmp.ne.s32.totalorder %s99, %s101
      %p108 = scmp.eq.s32.totalorder %s23, 1
      %p109 = por %p107, %p108
      %p110 = scmp.ne.s32.totalorder %s101, %s102
      %p111 = scmp.eq.s32.totalorder %s23, 0
      %p112 = por %p110, %p111
      %p113 = scmp.ne.s32.totalorder %s101, %s102
      %p114 = scmp.eq.s32.totalorder %s24, 1
      %p115 = por %p113, %p114
      %p117 = scmp.ne.s32.totalorder %s102, %s116
      %p118 = scmp.eq.s32.totalorder %s24, 0
      %p119 = por %p117, %p118
      %s121 = sadd.s32 %s120, 1
      %p124 = scmp.eq.s32.totalorder %s18, 1
      %p125 = scmp.ne.s32.totalorder %s120, %s122
      %p126 = scmp.eq.s32.totalorder %s18, 0
      %p127 = por %p125, %p126
      %p128 = scmp.ne.s32.totalorder %s120, %s122
      %p129 = scmp.eq.s32.totalorder %s23, 1
      %p130 = por %p128, %p129
      %p131 = scmp.ne.s32.totalorder %s122, %s123
      %p132 = scmp.eq.s32.totalorder %s23, 0
      %p133 = por %p131, %p132
      %p134 = scmp.ne.s32.totalorder %s122, %s123
      %p135 = scmp.eq.s32.totalorder %s24, 1
      %p136 = por %p134, %p135
      %p138 = scmp.ne.s32.totalorder %s123, %s137
      %p139 = scmp.eq.s32.totalorder %s24, 0
      %p140 = por %p138, %p139
      %s142 = sadd.s32 %s141, 1
      %p145 = scmp.eq.s32.totalorder %s18, 1
      %p146 = scmp.ne.s32.totalorder %s141, %s143
      %p147 = scmp.eq.s32.totalorder %s18, 0
      %p148 = por %p146, %p147
      %p149 = scmp.ne.s32.totalorder %s141, %s143
      %p150 = scmp.eq.s32.totalorder %s23, 1
      %p151 = por %p149, %p150
      %p152 = scmp.ne.s32.totalorder %s143, %s144
      %p153 = scmp.eq.s32.totalorder %s23, 0
      %p154 = por %p152, %p153
      %p155 = scmp.ne.s32.totalorder %s143, %s144
      %p156 = scmp.eq.s32.totalorder %s24, 1
      %p157 = por %p155, %p156
      %p159 = scmp.ne.s32.totalorder %s144, %s158
      %p160 = scmp.eq.s32.totalorder %s24, 0
      %p161 = por %p159, %p160
      %s163 = sadd.s32 %s162, 1
      %p166 = scmp.eq.s32.totalorder %s18, 1
      %p167 = scmp.ne.s32.totalorder %s162, %s164
      %p168 = scmp.eq.s32.totalorder %s18, 0
      %p169 = por %p167, %p168
      %p170 = scmp.ne.s32.totalorder %s162, %s164
      %p171 = scmp.eq.s32.totalorder %s23, 1
      %p172 = por %p170, %p171
      %p173 = scmp.ne.s32.totalorder %s164, %s165
      %p174 = scmp.eq.s32.totalorder %s23, 0
      %p175 = por %p173, %p174
      %p176 = scmp.ne.s32.totalorder %s164, %s165
      %p177 = scmp.eq.s32.totalorder %s24, 1
      %p178 = por %p176, %p177
      %p180 = scmp.ne.s32.totalorder %s165, %s179
      %p181 = scmp.eq.s32.totalorder %s24, 0
      %p182 = por %p180, %p181
      %s184 = sadd.s32 %s183, 1
      %p187 = scmp.eq.s32.totalorder %s18, 1
      %p188 = scmp.ne.s32.totalorder %s183, %s185
      %p189 = scmp.eq.s32.totalorder %s18, 0
      %p190 = por %p188, %p189
      %p191 = scmp.ne.s32.totalorder %s183, %s185
      %p192 = scmp.eq.s32.totalorder %s23, 1
      %p193 = por %p191, %p192
      %p194 = scmp.ne.s32.totalorder %s185, %s186
      %p195 = scmp.eq.s32.totalorder %s23, 0
      %p196 = por %p194, %p195
      %p197 = scmp.ne.s32.totalorder %s185, %s186
      %p198 = scmp.eq.s32.totalorder %s24, 1
      %p199 = por %p197, %p198
      %p201 = scmp.ne.s32.totalorder %s186, %s200
      %p202 = scmp.eq.s32.totalorder %s24, 0
      %p203 = por %p201, %p202
      %s205 = sadd.s32 %s204, 1
      %p208 = scmp.eq.s32.totalorder %s18, 1
      %p209 = scmp.ne.s32.totalorder %s204, %s206
      %p210 = scmp.eq.s32.totalorder %s18, 0
      %p211 = por %p209, %p210
      %p212 = scmp.ne.s32.totalorder %s204, %s206
      %p213 = scmp.eq.s32.totalorder %s23, 1
      %p214 = por %p212, %p213
      %p215 = scmp.ne.s32.totalorder %s206, %s207
      %p216 = scmp.eq.s32.totalorder %s23, 0
      %p217 = por %p215, %p216
      %p218 = scmp.ne.s32.totalorder %s206, %s207
      %p219 = scmp.eq.s32.totalorder %s24, 1
      %p220 = por %p218, %p219
      %p222 = scmp.ne.s32.totalorder %s207, %s221
      %p223 = scmp.eq.s32.totalorder %s24, 0
      %p224 = por %p222, %p223
      %s225 = ssub.s32 %s18, %s25
      %p226 = scmp.eq.s32.totalorder %s225, 0
      %s228 = sadd.s32 %s227, 1
      %s229 = scalar_select %p226, %s227, %s228
      %p232 = pneg %p226
      %p233 = scmp.eq.s32.totalorder %s18, 1
      %p234 = por %p232, %p233
      %p235 = scmp.ne.s32.totalorder %s227, %s230
      %p236 = scmp.eq.s32.totalorder %s18, 0
      %p237 = por %p235, %p236
      %p238 = scmp.ne.s32.totalorder %s227, %s230
      %p239 = scmp.eq.s32.totalorder %s23, 1
      %p240 = por %p238, %p239
      %p241 = scmp.ne.s32.totalorder %s230, %s231
      %p242 = scmp.eq.s32.totalorder %s23, 0
      %p243 = por %p241, %p242
      %p244 = scmp.ne.s32.totalorder %s230, %s231
      %p245 = scmp.eq.s32.totalorder %s24, 1
      %p246 = por %p244, %p245
      %p248 = scmp.ne.s32.totalorder %s231, %s247
      %p249 = scmp.eq.s32.totalorder %s24, 0
      %p250 = por %p248, %p249
      %p251 = scmp.le.s32.totalorder 1, %s18
      %p252 = scmp.lt.s32.totalorder %s18, 3
      %p253 = pnand %p251, %p252
      %p254 = pneg %p253
      // Predicated region
      $region9: #{conv_up.1} parent=5 // pred_check
        _
      $region10: #{conv_up.1} parent=5 // pred_check_branch
        %256 = sbr.rel (%p253) target = $region12
      $region11: #{conv_up.1} parent=5 // pred_region
        %s257 = ssub.s32 %s18, 1
        // Predicated region
        $region13: #{conv_up.1} parent=11 // pred_check
          %p258 = pneg %p91
        $region14: #{conv_up.1} parent=11 // pred_check_branch
          %260 = sbr.rel (%p258) target = $region16
        $region15: #{conv_up.1} parent=11 // pred_region
          _
        $region16: #{conv_up.1} parent=11 // pred_fallthru
          _
        // Predicated region
        $region17: #{conv_up.1} parent=11 // pred_check
          %p261 = pneg %p112
        $region18: #{conv_up.1} parent=11 // pred_check_branch
          %263 = sbr.rel (%p261) target = $region20
        $region19: #{conv_up.1} parent=11 // pred_region
          _
        $region20: #{conv_up.1} parent=11 // pred_fallthru
          _
        // Predicated region
        $region21: #{conv_up.1} parent=11 // pred_check
          %p264 = pneg %p133
        $region22: #{conv_up.1} parent=11 // pred_check_branch
          %266 = sbr.rel (%p264) target = $region24
        $region23: #{conv_up.1} parent=11 // pred_region
          _
        $region24: #{conv_up.1} parent=11 // pred_fallthru
          _
        // Predicated region
        $region25: #{conv_up.1} parent=11 // pred_check
          %p267 = pneg %p154
        $region26: #{conv_up.1} parent=11 // pred_check_branch
          %269 = sbr.rel (%p267) target = $region28
        $region27: #{conv_up.1} parent=11 // pred_region
          _
        $region28: #{conv_up.1} parent=11 // pred_fallthru
          _
        // Predicated region
        $region29: #{conv_up.1} parent=11 // pred_check
          %p270 = pneg %p175
        $region30: #{conv_up.1} parent=11 // pred_check_branch
          %272 = sbr.rel (%p270) target = $region32
        $region31: #{conv_up.1} parent=11 // pred_region
          _
        $region32: #{conv_up.1} parent=11 // pred_fallthru
          _
        // Predicated region
        $region33: #{conv_up.1} parent=11 // pred_check
          %p273 = pneg %p196
        $region34: #{conv_up.1} parent=11 // pred_check_branch
          %275 = sbr.rel (%p273) target = $region36
        $region35: #{conv_up.1} parent=11 // pred_region
          _
        $region36: #{conv_up.1} parent=11 // pred_fallthru
          _
        // Predicated region
        $region37: #{conv_up.1} parent=11 // pred_check
          %p276 = pneg %p217
        $region38: #{conv_up.1} parent=11 // pred_check_branch
          %278 = sbr.rel (%p276) target = $region40
        $region39: #{conv_up.1} parent=11 // pred_region
          _
        $region40: #{conv_up.1} parent=11 // pred_fallthru
          _
      $region12: #{conv_up.1} parent=5 // pred_fallthru
        _
      %p279 = scmp.lt.s32.totalorder %s18, 2
      // Predicated region
      $region41: #{conv_up.1} parent=5 // pred_check
        %p280 = pneg %p279
      $region42: #{conv_up.1} parent=5 // pred_check_branch
        %282 = sbr.rel (%p280) target = $region44
      $region43: #{conv_up.1} parent=5 // pred_region
        // Predicated region
        $region45: #{conv_up.1} parent=43 // pred_check
          %p283 = pneg %p38
        $region46: #{conv_up.1} parent=43 // pred_check_branch
          %285 = sbr.rel (%p283) target = $region48
        $region47: #{conv_up.1} parent=43 // pred_region
          %p286 = scmp.lt.s32.totalorder %s18, 1
          %s287 = scalar_select %p286, %s18, 1
          %s288 = smul.addr %s287, 16
          %s289 = smul.addr %s288, 8
          %s290 = scalar_lea.vmem %s0, %s289
        $region48: #{conv_up.1} parent=43 // pred_fallthru
          _
        // Predicated region
        $region49: #{conv_up.1} parent=43 // pred_check
          %p291 = pneg %p64
        $region50: #{conv_up.1} parent=43 // pred_check_branch
          %293 = sbr.rel (%p291) target = $region52
        $region51: #{conv_up.1} parent=43 // pred_region
          %p294 = scmp.lt.s32.totalorder %s18, 1
          %s295 = scalar_select %p294, %s18, 1
          %s296 = smul.addr %s295, 16
          %s297 = smul.addr %s296, 8
          %s298 = scalar_lea.vmem %s1, %s297
        $region52: #{conv_up.1} parent=43 // pred_fallthru
          _
      $region44: #{conv_up.1} parent=5 // pred_fallthru
        _
      %p299 = scmp.le.s32.totalorder 1, %s18
      %p300 = scmp.lt.s32.totalorder %s18, 3
      %p301 = pnand %p299, %p300
      %p302 = pneg %p301
      // Predicated region
      $region53: #{conv_up.1} parent=5 // pred_check
        _
      $region54: #{conv_up.1} parent=5 // pred_check_branch
        %304 = sbr.rel (%p301) target = $region56
      $region55: #{conv_up.1} parent=5 // pred_region
        %s305 = ssub.s32 %s18, 1
        %p306 = scmp.lt.s32.totalorder %s23, 1
        %s307 = scalar_select %p306, %s23, 1
        %s308 = smul.addr %s307, 16
        %s309 = smul.addr %s308, 8
        %s310 = scalar_lea.vmem %s0, %s309
        %p311 = pneg %p44
        %p312 = pneg %p41
        %p313 = scmp.lt.s32.totalorder %s23, 1
        %s314 = scalar_select %p313, %s23, 1
        %s315 = smul.addr %s314, 16
        %s316 = smul.addr %s315, 8
        %s317 = scalar_lea.vmem %s1, %s316
        %p318 = pneg %p70
        %p319 = pneg %p67
        %p320 = pneg %p91
        %p321 = pneg %p88
        %p322 = pneg %p112
        %p323 = pneg %p109
        %p324 = pneg %p133
        %p325 = pneg %p130
        %p326 = pneg %p154
        %p327 = pneg %p151
        %p328 = pneg %p175
        %p329 = pneg %p172
        %p330 = pneg %p196
        %p331 = pneg %p193
        %p332 = pneg %p217
        %p333 = pneg %p214
        %p334 = pneg %p243
        %p335 = pneg %p240
        %s336 = sand.u32 %s230, 1
        %s337 = scalar_lea.sflag [#allocation3], %s336
        %s338 = sand.u32 %s230, 1
        %s339 = smul.addr %s338, 128
        %s340 = scalar_lea.vmem [#allocation2], %s339
        %p341 = scmp.lt.s32.totalorder %s23, 1
        %s342 = scalar_select %p341, %s23, 1
        %s343 = smul.addr %s342, 16
        %s344 = smul.addr %s343, 8
        %s345 = scalar_lea.vmem %s0, %s344
        %p346 = scmp.lt.s32.totalorder %s23, 1
        %s347 = scalar_select %p346, %s23, 1
        %s348 = smul.addr %s347, 16
        %s349 = smul.addr %s348, 8
        %s350 = scalar_lea.vmem %s1, %s349
        %v351 = vlaneseq
        %v352 = vshrl.u32 %v351, 7
        %v353 = vadd.s32 %v352, 8
        %v354 = vlaneseq
        %v355 = vand.u32 %v354, 127
        %v356 = vmul.u32 %v352, 2
        %v357 = vmul.u32 %v353, 2
        %vm358 = vcmp.eq.s32.totalorder %v355, %v356
        %vm359 = vcmp.eq.s32.totalorder %v355, %v357
        %v360 = vsel %vm358, 1, 0
        %v361 = vsel %vm359, 1, 0
        %v362 = vcvt.s32.f32 %v360
        %v363 = vcvt.s32.f32 %v361
        %v364 = vadd.s32 %v356, 1
        %v365 = vadd.s32 %v357, 1
        %vm366 = vcmp.eq.s32.totalorder %v355, %v364
        %vm367 = vcmp.eq.s32.totalorder %v355, %v365
        %v368 = vsel %vm366, 1, 0
        %v369 = vsel %vm367, 1, 0
        %v370 = vcvt.s32.f32 %v368
        %v371 = vcvt.s32.f32 %v369
        %v372 = vadd.s32 %v352, 16
        %v373 = vadd.s32 %v352, 24
        %v374 = vsub.s32 %v355, 1
        %vm375 = vcmp.eq.s32.totalorder %v352, %v374
        %vm376 = vcmp.eq.s32.totalorder %v353, %v374
        %vm377 = vcmp.eq.s32.totalorder %v372, %v374
        %vm378 = vcmp.eq.s32.totalorder %v373, %v374
        %v379 = vsel %vm375, 1, 0
        %v380 = vsel %vm376, 1, 0
        %v381 = vsel %vm377, 1, 0
        %v382 = vsel %vm378, 1, 0
        %v383 = vcvt.s32.f32 %v379
        %v384 = vcvt.s32.f32 %v380
        %v385 = vcvt.s32.f32 %v381
        %v386 = vcvt.s32.f32 %v382
        %vm387 = vcmp.eq.s32.totalorder %v352, %v355
        %vm388 = vcmp.eq.s32.totalorder %v353, %v355
        %vm389 = vcmp.eq.s32.totalorder %v372, %v355
        %vm390 = vcmp.eq.s32.totalorder %v373, %v355
        %v391 = vsel %vm387, 1, 0
        %v392 = vsel %vm388, 1, 0
        %v393 = vsel %vm389, 1, 0
        %v394 = vsel %vm390, 1, 0
        %v395 = vcvt.s32.f32 %v391
        %v396 = vcvt.s32.f32 %v392
        %v397 = vcvt.s32.f32 %v393
        %v398 = vcvt.s32.f32 %v394
        %v399 = vadd.s32 %v355, 1
        %vm400 = vcmp.eq.s32.totalorder %v352, %v399
        %vm401 = vcmp.eq.s32.totalorder %v353, %v399
        %vm402 = vcmp.eq.s32.totalorder %v372, %v399
        %vm403 = vcmp.eq.s32.totalorder %v373, %v399
        %v404 = vsel %vm400, 1, 0
        %v405 = vsel %vm401, 1, 0
        %v406 = vsel %vm402, 1, 0
        %v407 = vsel %vm403, 1, 0
        %v408 = vcvt.s32.f32 %v404
        %v409 = vcvt.s32.f32 %v405
        %v410 = vcvt.s32.f32 %v406
        %v411 = vcvt.s32.f32 %v407
        %v412 = vld [vmem:[%s345] sm:$0xff]
        %v413 = vld [vmem:[%s345 + $0x8] sm:$0xff]
        %v414 = vld [vmem:[%s345 + $0x10] sm:$0xff]
        %v415 = vld [vmem:[%s345 + $0x18] sm:$0xff]
        %v416 = vld [vmem:[%s345 + $0x20] sm:$0xff]
        %v417 = vld [vmem:[%s345 + $0x28] sm:$0xff]
        %v418 = vld [vmem:[%s345 + $0x30] sm:$0xff]
        %v419 = vld [vmem:[%s345 + $0x38] sm:$0xff]
        %v420 = vld [vmem:[%s345 + $0x40] sm:$0xff]
        %v421 = vld [vmem:[%s345 + $0x48] sm:$0xff]
        %v422 = vld [vmem:[%s345 + $0x50] sm:$0xff]
        %v423 = vld [vmem:[%s345 + $0x58] sm:$0xff]
        %v424 = vld [vmem:[%s345 + $0x60] sm:$0xff]
        %v425 = vld [vmem:[%s345 + $0x68] sm:$0xff]
        %v426 = vld [vmem:[%s345 + $0x70] sm:$0xff]
        %v427 = vld [vmem:[%s345 + $0x78] sm:$0xff]
        %vm428 = vcmask 130048
        %v430 = vsel %vm428, %v412, 0
        %v433 = vsel %vm428, %v413, 0
        %v436 = vsel %vm428, %v414, 0
        %v439 = vsel %vm428, %v415, 0
        %v442 = vsel %vm428, %v416, 0
        %v445 = vsel %vm428, %v417, 0
        %v448 = vsel %vm428, %v418, 0
        %v451 = vsel %vm428, %v419, 0
        %v454 = vsel %vm428, %v420, 0
        %v457 = vsel %vm428, %v421, 0
        %v460 = vsel %vm428, %v422, 0
        %v463 = vsel %vm428, %v423, 0
        %v466 = vsel %vm428, %v424, 0
        %v469 = vsel %vm428, %v425, 0
        %v472 = vsel %vm428, %v426, 0
        %v475 = vsel %vm428, %v427, 0
        %477 = vmatpush.msra.mxu0 0.0
        %478 = vmatpush.msra.mxu0 0.0
        %479 = vmatpush.msra.mxu0 0.0
        %480 = vmatpush.msra.mxu0 0.0
        %481 = vmatpush.msra.mxu0 0.0
        %482 = vmatpush.msra.mxu0 0.0
        %483 = vmatpush.msra.mxu0 0.0
        %484 = vmatpush.msra.mxu0 0.0
        %485 = vmatpush.msra.mxu0 0.0
        %486 = vmatpush.msra.mxu0 0.0
        %487 = vmatpush.msra.mxu0 0.0
        %488 = vmatpush.msra.mxu0 0.0
        %489 = vmatpush.msra.mxu0 0.0
        %490 = vmatpush.msra.mxu0 0.0
        %491 = vmatpush.msra.mxu0 %v363
        %492 = vmatpush.msra.mxu0 %v362
        %493 = vmatmul.f32.gmra.mxu0 %v430
        %v494 = vpop.f32.mrf.mxu0
        %v495 = vadd.f32 0.0, %v494
        %496 = vmatmul.f32.gmra.mxu0 %v433
        %v497 = vpop.f32.mrf.mxu0
        %v498 = vadd.f32 0.0, %v497
        %499 = vmatmul.f32.gmra.mxu0 %v436
        %v500 = vpop.f32.mrf.mxu0
        %v501 = vadd.f32 0.0, %v500
        %502 = vmatmul.f32.gmra.mxu0 %v439
        %v503 = vpop.f32.mrf.mxu0
        %v504 = vadd.f32 0.0, %v503
        %505 = vmatmul.f32.gmra.mxu0 %v442
        %v506 = vpop.f32.mrf.mxu0
        %v507 = vadd.f32 0.0, %v506
        %508 = vmatmul.f32.gmra.mxu0 %v445
        %v509 = vpop.f32.mrf.mxu0
        %v510 = vadd.f32 0.0, %v509
        %511 = vmatmul.f32.gmra.mxu0 %v448
        %v512 = vpop.f32.mrf.mxu0
        %v513 = vadd.f32 0.0, %v512
        %514 = vmatmul.f32.gmra.mxu0 %v451
        %v515 = vpop.f32.mrf.mxu0
        %v516 = vadd.f32 0.0, %v515
        %517 = vmatmul.f32.gmra.mxu0 %v454
        %v518 = vpop.f32.mrf.mxu0
        %v519 = vadd.f32 0.0, %v518
        %520 = vmatmul.f32.gmra.mxu0 %v457
        %v521 = vpop.f32.mrf.mxu0
        %v522 = vadd.f32 0.0, %v521
        %523 = vmatmul.f32.gmra.mxu0 %v460
        %v524 = vpop.f32.mrf.mxu0
        %v525 = vadd.f32 0.0, %v524
        %526 = vmatmul.f32.gmra.mxu0 %v463
        %v527 = vpop.f32.mrf.mxu0
        %v528 = vadd.f32 0.0, %v527
        %529 = vmatmul.f32.gmra.mxu0 %v466
        %v530 = vpop.f32.mrf.mxu0
        %v531 = vadd.f32 0.0, %v530
        %532 = vmatmul.f32.gmra.mxu0 %v469
        %v533 = vpop.f32.mrf.mxu0
        %v534 = vadd.f32 0.0, %v533
        %535 = vmatmul.f32.gmra.mxu0 %v472
        %v536 = vpop.f32.mrf.mxu0
        %v537 = vadd.f32 0.0, %v536
        %538 = vmatmul.f32.gmra.mxu0 %v475
        %v539 = vpop.f32.mrf.mxu0
        %v540 = vadd.f32 0.0, %v539
        %541 = vdwg.mxu0
        %542 = vmatpush.msra.mxu0 0.0
        %543 = vmatpush.msra.mxu0 0.0
        %544 = vmatpush.msra.mxu0 0.0
        %545 = vmatpush.msra.mxu0 0.0
        %546 = vmatpush.msra.mxu0 0.0
        %547 = vmatpush.msra.mxu0 0.0
        %548 = vmatpush.msra.mxu0 0.0
        %549 = vmatpush.msra.mxu0 0.0
        %550 = vmatpush.msra.mxu0 0.0
        %551 = vmatpush.msra.mxu0 0.0
        %552 = vmatpush.msra.mxu0 0.0
        %553 = vmatpush.msra.mxu0 0.0
        %554 = vmatpush.msra.mxu0 0.0
        %555 = vmatpush.msra.mxu0 0.0
        %556 = vmatpush.msra.mxu0 %v371
        %557 = vmatpush.msra.mxu0 %v370
        %558 = vmatmul.f32.gmra.mxu0 %v430
        %v559 = vpop.f32.mrf.mxu0
        %v560 = vadd.f32 0.0, %v559
        %561 = vmatmul.f32.gmra.mxu0 %v433
        %v562 = vpop.f32.mrf.mxu0
        %v563 = vadd.f32 0.0, %v562
        %564 = vmatmul.f32.gmra.mxu0 %v436
        %v565 = vpop.f32.mrf.mxu0
        %v566 = vadd.f32 0.0, %v565
        %567 = vmatmul.f32.gmra.mxu0 %v439
        %v568 = vpop.f32.mrf.mxu0
        %v569 = vadd.f32 0.0, %v568
        %570 = vmatmul.f32.gmra.mxu0 %v442
        %v571 = vpop.f32.mrf.mxu0
        %v572 = vadd.f32 0.0, %v571
        %573 = vmatmul.f32.gmra.mxu0 %v445
        %v574 = vpop.f32.mrf.mxu0
        %v575 = vadd.f32 0.0, %v574
        %576 = vmatmul.f32.gmra.mxu0 %v448
        %v577 = vpop.f32.mrf.mxu0
        %v578 = vadd.f32 0.0, %v577
        %579 = vmatmul.f32.gmra.mxu0 %v451
        %v580 = vpop.f32.mrf.mxu0
        %v581 = vadd.f32 0.0, %v580
        %582 = vmatmul.f32.gmra.mxu0 %v454
        %v583 = vpop.f32.mrf.mxu0
        %v584 = vadd.f32 0.0, %v583
        %585 = vmatmul.f32.gmra.mxu0 %v457
        %v586 = vpop.f32.mrf.mxu0
        %v587 = vadd.f32 0.0, %v586
        %588 = vmatmul.f32.gmra.mxu0 %v460
        %v589 = vpop.f32.mrf.mxu0
        %v590 = vadd.f32 0.0, %v589
        %591 = vmatmul.f32.gmra.mxu0 %v463
        %v592 = vpop.f32.mrf.mxu0
        %v593 = vadd.f32 0.0, %v592
        %594 = vmatmul.f32.gmra.mxu0 %v466
        %v595 = vpop.f32.mrf.mxu0
        %v596 = vadd.f32 0.0, %v595
        %597 = vmatmul.f32.gmra.mxu0 %v469
        %v598 = vpop.f32.mrf.mxu0
        %v599 = vadd.f32 0.0, %v598
        %600 = vmatmul.f32.gmra.mxu0 %v472
        %v601 = vpop.f32.mrf.mxu0
        %v602 = vadd.f32 0.0, %v601
        %603 = vmatmul.f32.gmra.mxu0 %v475
        %v604 = vpop.f32.mrf.mxu0
        %v605 = vadd.f32 0.0, %v604
        %606 = vdwg.mxu0
        %v607 = vld [vmem:[%s2] sm:$0xff]
        %v608 = vld [vmem:[%s2 + $0x8] sm:$0xff]
        %v609 = vld [vmem:[%s2 + $0x10] sm:$0xff]
        %v610 = vld [vmem:[%s2 + $0x18] sm:$0xff]
        %v611 = vld [vmem:[%s2 + $0x20] sm:$0xff]
        %v612 = vld [vmem:[%s2 + $0x28] sm:$0xff]
        %v613 = vld [vmem:[%s2 + $0x30] sm:$0xff]
        %v614 = vld [vmem:[%s2 + $0x38] sm:$0xff]
        %v615 = vld [vmem:[%s2 + $0x40] sm:$0xff]
        %v616 = vld [vmem:[%s2 + $0x48] sm:$0xff]
        %v617 = vld [vmem:[%s2 + $0x50] sm:$0xff]
        %v618 = vld [vmem:[%s2 + $0x58] sm:$0xff]
        %v619 = vld [vmem:[%s2 + $0x60] sm:$0xff]
        %v620 = vld [vmem:[%s2 + $0x68] sm:$0xff]
        %v621 = vld [vmem:[%s2 + $0x70] sm:$0xff]
        %v622 = vld [vmem:[%s2 + $0x78] sm:$0xff]
        %v623 = vld [vmem:[%s3] sm:$0xff]
        %v624 = vld [vmem:[%s3 + $0x8] sm:$0xff]
        %v625 = vld [vmem:[%s3 + $0x10] sm:$0xff]
        %v626 = vld [vmem:[%s3 + $0x18] sm:$0xff]
        %v627 = vld [vmem:[%s3 + $0x20] sm:$0xff]
        %v628 = vld [vmem:[%s3 + $0x28] sm:$0xff]
        %v629 = vld [vmem:[%s3 + $0x30] sm:$0xff]
        %v630 = vld [vmem:[%s3 + $0x38] sm:$0xff]
        %v631 = vld [vmem:[%s3 + $0x40] sm:$0xff]
        %v632 = vld [vmem:[%s3 + $0x48] sm:$0xff]
        %v633 = vld [vmem:[%s3 + $0x50] sm:$0xff]
        %v634 = vld [vmem:[%s3 + $0x58] sm:$0xff]
        %v635 = vld [vmem:[%s3 + $0x60] sm:$0xff]
        %v636 = vld [vmem:[%s3 + $0x68] sm:$0xff]
        %v637 = vld [vmem:[%s3 + $0x70] sm:$0xff]
        %v638 = vld [vmem:[%s3 + $0x78] sm:$0xff]
        %639 = vmatpush.msra.mxu0 %v605
        %640 = vmatpush.msra.mxu0 %v602
        %641 = vmatpush.msra.mxu0 %v599
        %642 = vmatpush.msra.mxu0 %v596
        %643 = vmatpush.msra.mxu0 %v593
        %644 = vmatpush.msra.mxu0 %v590
        %645 = vmatpush.msra.mxu0 %v587
        %646 = vmatpush.msra.mxu0 %v584
        %647 = vmatpush.msra.mxu0 %v581
        %648 = vmatpush.msra.mxu0 %v578
        %649 = vmatpush.msra.mxu0 %v575
        %650 = vmatpush.msra.mxu0 %v572
        %651 = vmatpush.msra.mxu0 %v569
        %652 = vmatpush.msra.mxu0 %v566
        %653 = vmatpush.msra.mxu0 %v563
        %654 = vmatpush.msra.mxu0 %v560
        %655 = vmatmul.f32.gmra.mxu0 %v623
        %v656 = vpop.f32.mrf.mxu0
        %v657 = vadd.f32 0.0, %v656
        %658 = vmatmul.f32.gmra.mxu0 %v624
        %v659 = vpop.f32.mrf.mxu0
        %v660 = vadd.f32 0.0, %v659
        %661 = vmatmul.f32.gmra.mxu0 %v625
        %v662 = vpop.f32.mrf.mxu0
        %v663 = vadd.f32 0.0, %v662
        %664 = vmatmul.f32.gmra.mxu0 %v626
        %v665 = vpop.f32.mrf.mxu0
        %v666 = vadd.f32 0.0, %v665
        %667 = vmatmul.f32.gmra.mxu0 %v627
        %v668 = vpop.f32.mrf.mxu0
        %v669 = vadd.f32 0.0, %v668
        %670 = vmatmul.f32.gmra.mxu0 %v628
        %v671 = vpop.f32.mrf.mxu0
        %v672 = vadd.f32 0.0, %v671
        %673 = vmatmul.f32.gmra.mxu0 %v629
        %v674 = vpop.f32.mrf.mxu0
        %v675 = vadd.f32 0.0, %v674
        %676 = vmatmul.f32.gmra.mxu0 %v630
        %v677 = vpop.f32.mrf.mxu0
        %v678 = vadd.f32 0.0, %v677
        %679 = vmatmul.f32.gmra.mxu0 %v631
        %v680 = vpop.f32.mrf.mxu0
        %v681 = vadd.f32 0.0, %v680
        %682 = vmatmul.f32.gmra.mxu0 %v632
        %v683 = vpop.f32.mrf.mxu0
        %v684 = vadd.f32 0.0, %v683
        %685 = vmatmul.f32.gmra.mxu0 %v633
        %v686 = vpop.f32.mrf.mxu0
        %v687 = vadd.f32 0.0, %v686
        %688 = vmatmul.f32.gmra.mxu0 %v634
        %v689 = vpop.f32.mrf.mxu0
        %v690 = vadd.f32 0.0, %v689
        %691 = vmatmul.f32.gmra.mxu0 %v635
        %v692 = vpop.f32.mrf.mxu0
        %v693 = vadd.f32 0.0, %v692
        %694 = vmatmul.f32.gmra.mxu0 %v636
        %v695 = vpop.f32.mrf.mxu0
        %v696 = vadd.f32 0.0, %v695
        %697 = vmatmul.f32.gmra.mxu0 %v637
        %v698 = vpop.f32.mrf.mxu0
        %v699 = vadd.f32 0.0, %v698
        %700 = vmatmul.f32.gmra.mxu0 %v638
        %v701 = vpop.f32.mrf.mxu0
        %v702 = vadd.f32 0.0, %v701
        %703 = vdwg.mxu0
        %704 = vmatpush.msra.mxu0 %v540
        %705 = vmatpush.msra.mxu0 %v537
        %706 = vmatpush.msra.mxu0 %v534
        %707 = vmatpush.msra.mxu0 %v531
        %708 = vmatpush.msra.mxu0 %v528
        %709 = vmatpush.msra.mxu0 %v525
        %710 = vmatpush.msra.mxu0 %v522
        %711 = vmatpush.msra.mxu0 %v519
        %712 = vmatpush.msra.mxu0 %v516
        %713 = vmatpush.msra.mxu0 %v513
        %714 = vmatpush.msra.mxu0 %v510
        %715 = vmatpush.msra.mxu0 %v507
        %716 = vmatpush.msra.mxu0 %v504
        %717 = vmatpush.msra.mxu0 %v501
        %718 = vmatpush.msra.mxu0 %v498
        %719 = vmatpush.msra.mxu0 %v495
        %720 = vmatmul.f32.gmra.mxu0 %v607
        %v721 = vpop.f32.mrf.mxu0
        %v722 = vadd.f32 %v657, %v721
        %723 = vmatmul.f32.gmra.mxu0 %v608
        %v724 = vpop.f32.mrf.mxu0
        %v725 = vadd.f32 %v660, %v724
        %726 = vmatmul.f32.gmra.mxu0 %v609
        %v727 = vpop.f32.mrf.mxu0
        %v728 = vadd.f32 %v663, %v727
        %729 = vmatmul.f32.gmra.mxu0 %v610
        %v730 = vpop.f32.mrf.mxu0
        %v731 = vadd.f32 %v666, %v730
        %732 = vmatmul.f32.gmra.mxu0 %v611
        %v733 = vpop.f32.mrf.mxu0
        %v734 = vadd.f32 %v669, %v733
        %735 = vmatmul.f32.gmra.mxu0 %v612
        %v736 = vpop.f32.mrf.mxu0
        %v737 = vadd.f32 %v672, %v736
        %738 = vmatmul.f32.gmra.mxu0 %v613
        %v739 = vpop.f32.mrf.mxu0
        %v740 = vadd.f32 %v675, %v739
        %741 = vmatmul.f32.gmra.mxu0 %v614
        %v742 = vpop.f32.mrf.mxu0
        %v743 = vadd.f32 %v678, %v742
        %744 = vmatmul.f32.gmra.mxu0 %v615
        %v745 = vpop.f32.mrf.mxu0
        %v746 = vadd.f32 %v681, %v745
        %747 = vmatmul.f32.gmra.mxu0 %v616
        %v748 = vpop.f32.mrf.mxu0
        %v749 = vadd.f32 %v684, %v748
        %750 = vmatmul.f32.gmra.mxu0 %v617
        %v751 = vpop.f32.mrf.mxu0
        %v752 = vadd.f32 %v687, %v751
        %753 = vmatmul.f32.gmra.mxu0 %v618
        %v754 = vpop.f32.mrf.mxu0
        %v755 = vadd.f32 %v690, %v754
        %756 = vmatmul.f32.gmra.mxu0 %v619
        %v757 = vpop.f32.mrf.mxu0
        %v758 = vadd.f32 %v693, %v757
        %759 = vmatmul.f32.gmra.mxu0 %v620
        %v760 = vpop.f32.mrf.mxu0
        %v761 = vadd.f32 %v696, %v760
        %762 = vmatmul.f32.gmra.mxu0 %v621
        %v763 = vpop.f32.mrf.mxu0
        %v764 = vadd.f32 %v699, %v763
        %765 = vmatmul.f32.gmra.mxu0 %v622
        %v766 = vpop.f32.mrf.mxu0
        %v767 = vadd.f32 %v702, %v766
        %768 = vdwg.mxu0
        %v769 = vld [vmem:[%s4] sm:$0xff]
        %v770 = vld [vmem:[%s4 + $0x8] sm:$0xff]
        %v771 = vld [vmem:[%s4 + $0x10] sm:$0xff]
        %v772 = vld [vmem:[%s4 + $0x18] sm:$0xff]
        %v773 = vld [vmem:[%s4 + $0x20] sm:$0xff]
        %v774 = vld [vmem:[%s4 + $0x28] sm:$0xff]
        %v775 = vld [vmem:[%s4 + $0x30] sm:$0xff]
        %v776 = vld [vmem:[%s4 + $0x38] sm:$0xff]
        %v777 = vld [vmem:[%s4 + $0x40] sm:$0xff]
        %v778 = vld [vmem:[%s4 + $0x48] sm:$0xff]
        %v779 = vld [vmem:[%s4 + $0x50] sm:$0xff]
        %v780 = vld [vmem:[%s4 + $0x58] sm:$0xff]
        %v781 = vld [vmem:[%s4 + $0x60] sm:$0xff]
        %v782 = vld [vmem:[%s4 + $0x68] sm:$0xff]
        %v783 = vld [vmem:[%s4 + $0x70] sm:$0xff]
        %v784 = vld [vmem:[%s4 + $0x78] sm:$0xff]
        %786 = vset.pattern.permute.xlu0 0
        %787 = vperm.xlu0 %786, %v769
        %v788 = vpop.permute.xlu0 %787
        %791 = vset.pattern.permute.xlu0 0
        %792 = vperm.xlu0 %791, %v770
        %v793 = vpop.permute.xlu0 %792
        %796 = vset.pattern.permute.xlu0 0
        %797 = vperm.xlu0 %796, %v771
        %v798 = vpop.permute.xlu0 %797
        %801 = vset.pattern.permute.xlu0 0
        %802 = vperm.xlu0 %801, %v772
        %v803 = vpop.permute.xlu0 %802
        %806 = vset.pattern.permute.xlu0 0
        %807 = vperm.xlu0 %806, %v773
        %v808 = vpop.permute.xlu0 %807
        %811 = vset.pattern.permute.xlu0 0
        %812 = vperm.xlu0 %811, %v774
        %v813 = vpop.permute.xlu0 %812
        %816 = vset.pattern.permute.xlu0 0
        %817 = vperm.xlu0 %816, %v775
        %v818 = vpop.permute.xlu0 %817
        %821 = vset.pattern.permute.xlu0 0
        %822 = vperm.xlu0 %821, %v776
        %v823 = vpop.permute.xlu0 %822
        %826 = vset.pattern.permute.xlu0 0
        %827 = vperm.xlu0 %826, %v777
        %v828 = vpop.permute.xlu0 %827
        %831 = vset.pattern.permute.xlu0 0
        %832 = vperm.xlu0 %831, %v778
        %v833 = vpop.permute.xlu0 %832
        %836 = vset.pattern.permute.xlu0 0
        %837 = vperm.xlu0 %836, %v779
        %v838 = vpop.permute.xlu0 %837
        %841 = vset.pattern.permute.xlu0 0
        %842 = vperm.xlu0 %841, %v780
        %v843 = vpop.permute.xlu0 %842
        %846 = vset.pattern.permute.xlu0 0
        %847 = vperm.xlu0 %846, %v781
        %v848 = vpop.permute.xlu0 %847
        %851 = vset.pattern.permute.xlu0 0
        %852 = vperm.xlu0 %851, %v782
        %v853 = vpop.permute.xlu0 %852
        %856 = vset.pattern.permute.xlu0 0
        %857 = vperm.xlu0 %856, %v783
        %v858 = vpop.permute.xlu0 %857
        %861 = vset.pattern.permute.xlu0 0
        %862 = vperm.xlu0 %861, %v784
        %v863 = vpop.permute.xlu0 %862
        %v865 = vadd.f32 %v722, %v788
        %v866 = vadd.f32 %v725, %v793
        %v867 = vadd.f32 %v728, %v798
        %v868 = vadd.f32 %v731, %v803
        %v869 = vadd.f32 %v734, %v808
        %v870 = vadd.f32 %v737, %v813
        %v871 = vadd.f32 %v740, %v818
        %v872 = vadd.f32 %v743, %v823
        %v873 = vadd.f32 %v746, %v828
        %v874 = vadd.f32 %v749, %v833
        %v875 = vadd.f32 %v752, %v838
        %v876 = vadd.f32 %v755, %v843
        %v877 = vadd.f32 %v758, %v848
        %v878 = vadd.f32 %v761, %v853
        %v879 = vadd.f32 %v764, %v858
        %v880 = vadd.f32 %v767, %v863
        %vm881 = vcmp.ge.f32.partialorder %v865, 0.0
        %vm882 = vcmp.ge.f32.partialorder %v866, 0.0
        %vm883 = vcmp.ge.f32.partialorder %v867, 0.0
        %vm884 = vcmp.ge.f32.partialorder %v868, 0.0
        %vm885 = vcmp.ge.f32.partialorder %v869, 0.0
        %vm886 = vcmp.ge.f32.partialorder %v870, 0.0
        %vm887 = vcmp.ge.f32.partialorder %v871, 0.0
        %vm888 = vcmp.ge.f32.partialorder %v872, 0.0
        %vm889 = vcmp.ge.f32.partialorder %v873, 0.0
        %vm890 = vcmp.ge.f32.partialorder %v874, 0.0
        %vm891 = vcmp.ge.f32.partialorder %v875, 0.0
        %vm892 = vcmp.ge.f32.partialorder %v876, 0.0
        %vm893 = vcmp.ge.f32.partialorder %v877, 0.0
        %vm894 = vcmp.ge.f32.partialorder %v878, 0.0
        %vm895 = vcmp.ge.f32.partialorder %v879, 0.0
        %vm896 = vcmp.ge.f32.partialorder %v880, 0.0
        %v897 = vmul.f32 %v865, 0.01
        %v898 = vmul.f32 %v866, 0.01
        %v899 = vmul.f32 %v867, 0.01
        %v900 = vmul.f32 %v868, 0.01
        %v901 = vmul.f32 %v869, 0.01
        %v902 = vmul.f32 %v870, 0.01
        %v903 = vmul.f32 %v871, 0.01
        %v904 = vmul.f32 %v872, 0.01
        %v905 = vmul.f32 %v873, 0.01
        %v906 = vmul.f32 %v874, 0.01
        %v907 = vmul.f32 %v875, 0.01
        %v908 = vmul.f32 %v876, 0.01
        %v909 = vmul.f32 %v877, 0.01
        %v910 = vmul.f32 %v878, 0.01
        %v911 = vmul.f32 %v879, 0.01
        %v912 = vmul.f32 %v880, 0.01
        %v913 = vsel %vm881, %v865, %v897
        %v914 = vsel %vm882, %v866, %v898
        %v915 = vsel %vm883, %v867, %v899
        %v916 = vsel %vm884, %v868, %v900
        %v917 = vsel %vm885, %v869, %v901
        %v918 = vsel %vm886, %v870, %v902
        %v919 = vsel %vm887, %v871, %v903
        %v920 = vsel %vm888, %v872, %v904
        %v921 = vsel %vm889, %v873, %v905
        %v922 = vsel %vm890, %v874, %v906
        %v923 = vsel %vm891, %v875, %v907
        %v924 = vsel %vm892, %v876, %v908
        %v925 = vsel %vm893, %v877, %v909
        %v926 = vsel %vm894, %v878, %v910
        %v927 = vsel %vm895, %v879, %v911
        %v928 = vsel %vm896, %v880, %v912
        %v929 = vld [vmem:[%s350] sm:$0xff]
        %v930 = vld [vmem:[%s350 + $0x8] sm:$0xff]
        %v931 = vld [vmem:[%s350 + $0x10] sm:$0xff]
        %v932 = vld [vmem:[%s350 + $0x18] sm:$0xff]
        %v933 = vld [vmem:[%s350 + $0x20] sm:$0xff]
        %v934 = vld [vmem:[%s350 + $0x28] sm:$0xff]
        %v935 = vld [vmem:[%s350 + $0x30] sm:$0xff]
        %v936 = vld [vmem:[%s350 + $0x38] sm:$0xff]
        %v937 = vld [vmem:[%s350 + $0x40] sm:$0xff]
        %v938 = vld [vmem:[%s350 + $0x48] sm:$0xff]
        %v939 = vld [vmem:[%s350 + $0x50] sm:$0xff]
        %v940 = vld [vmem:[%s350 + $0x58] sm:$0xff]
        %v941 = vld [vmem:[%s350 + $0x60] sm:$0xff]
        %v942 = vld [vmem:[%s350 + $0x68] sm:$0xff]
        %v943 = vld [vmem:[%s350 + $0x70] sm:$0xff]
        %v944 = vld [vmem:[%s350 + $0x78] sm:$0xff]
        %v945 = vadd.f32 %v913, %v929
        %v946 = vadd.f32 %v914, %v930
        %v947 = vadd.f32 %v915, %v931
        %v948 = vadd.f32 %v916, %v932
        %v949 = vadd.f32 %v917, %v933
        %v950 = vadd.f32 %v918, %v934
        %v951 = vadd.f32 %v919, %v935
        %v952 = vadd.f32 %v920, %v936
        %v953 = vadd.f32 %v921, %v937
        %v954 = vadd.f32 %v922, %v938
        %v955 = vadd.f32 %v923, %v939
        %v956 = vadd.f32 %v924, %v940
        %v957 = vadd.f32 %v925, %v941
        %v958 = vadd.f32 %v926, %v942
        %v959 = vadd.f32 %v927, %v943
        %v960 = vadd.f32 %v928, %v944
        %vm961 = vcmask 261120
        %v963 = vsel %vm961, %v945, 0
        %v966 = vsel %vm961, %v946, 0
        %v969 = vsel %vm961, %v947, 0
        %v972 = vsel %vm961, %v948, 0
        %v975 = vsel %vm961, %v949, 0
        %v978 = vsel %vm961, %v950, 0
        %v981 = vsel %vm961, %v951, 0
        %v984 = vsel %vm961, %v952, 0
        %v987 = vsel %vm961, %v953, 0
        %v990 = vsel %vm961, %v954, 0
        %v993 = vsel %vm961, %v955, 0
        %v996 = vsel %vm961, %v956, 0
        %v999 = vsel %vm961, %v957, 0
        %v1002 = vsel %vm961, %v958, 0
        %v1005 = vsel %vm961, %v959, 0
        %v1008 = vsel %vm961, %v960, 0
        %1010 = vmatpush.msra.mxu0 0.0
        %1011 = vmatpush.msra.mxu0 0.0
        %1012 = vmatpush.msra.mxu0 0.0
        %1013 = vmatpush.msra.mxu0 0.0
        %1014 = vmatpush.msra.mxu0 0.0
        %1015 = vmatpush.msra.mxu0 0.0
        %1016 = vmatpush.msra.mxu0 0.0
        %1017 = vmatpush.msra.mxu0 0.0
        %1018 = vmatpush.msra.mxu0 0.0
        %1019 = vmatpush.msra.mxu0 0.0
        %1020 = vmatpush.msra.mxu0 0.0
        %1021 = vmatpush.msra.mxu0 0.0
        %1022 = vmatpush.msra.mxu0 %v386
        %1023 = vmatpush.msra.mxu0 %v385
        %1024 = vmatpush.msra.mxu0 %v384
        %1025 = vmatpush.msra.mxu0 %v383
        %1026 = vmatmul.f32.gmra.mxu0 %v963
        %v1027 = vpop.f32.mrf.mxu0
        %v1028 = vadd.f32 0.0, %v1027
        %1029 = vmatmul.f32.gmra.mxu0 %v966
        %v1030 = vpop.f32.mrf.mxu0
        %v1031 = vadd.f32 0.0, %v1030
        %1032 = vmatmul.f32.gmra.mxu0 %v969
        %v1033 = vpop.f32.mrf.mxu0
        %v1034 = vadd.f32 0.0, %v1033
        %1035 = vmatmul.f32.gmra.mxu0 %v972
        %v1036 = vpop.f32.mrf.mxu0
        %v1037 = vadd.f32 0.0, %v1036
        %1038 = vmatmul.f32.gmra.mxu0 %v975
        %v1039 = vpop.f32.mrf.mxu0
        %v1040 = vadd.f32 0.0, %v1039
        %1041 = vmatmul.f32.gmra.mxu0 %v978
        %v1042 = vpop.f32.mrf.mxu0
        %v1043 = vadd.f32 0.0, %v1042
        %1044 = vmatmul.f32.gmra.mxu0 %v981
        %v1045 = vpop.f32.mrf.mxu0
        %v1046 = vadd.f32 0.0, %v1045
        %1047 = vmatmul.f32.gmra.mxu0 %v984
        %v1048 = vpop.f32.mrf.mxu0
        %v1049 = vadd.f32 0.0, %v1048
        %1050 = vmatmul.f32.gmra.mxu0 %v987
        %v1051 = vpop.f32.mrf.mxu0
        %v1052 = vadd.f32 0.0, %v1051
        %1053 = vmatmul.f32.gmra.mxu0 %v990
        %v1054 = vpop.f32.mrf.mxu0
        %v1055 = vadd.f32 0.0, %v1054
        %1056 = vmatmul.f32.gmra.mxu0 %v993
        %v1057 = vpop.f32.mrf.mxu0
        %v1058 = vadd.f32 0.0, %v1057
        %1059 = vmatmul.f32.gmra.mxu0 %v996
        %v1060 = vpop.f32.mrf.mxu0
        %v1061 = vadd.f32 0.0, %v1060
        %1062 = vmatmul.f32.gmra.mxu0 %v999
        %v1063 = vpop.f32.mrf.mxu0
        %v1064 = vadd.f32 0.0, %v1063
        %1065 = vmatmul.f32.gmra.mxu0 %v1002
        %v1066 = vpop.f32.mrf.mxu0
        %v1067 = vadd.f32 0.0, %v1066
        %1068 = vmatmul.f32.gmra.mxu0 %v1005
        %v1069 = vpop.f32.mrf.mxu0
        %v1070 = vadd.f32 0.0, %v1069
        %1071 = vmatmul.f32.gmra.mxu0 %v1008
        %v1072 = vpop.f32.mrf.mxu0
        %v1073 = vadd.f32 0.0, %v1072
        %1074 = vdwg.mxu0
        %1075 = vmatpush.msra.mxu0 0.0
        %1076 = vmatpush.msra.mxu0 0.0
        %1077 = vmatpush.msra.mxu0 0.0
        %1078 = vmatpush.msra.mxu0 0.0
        %1079 = vmatpush.msra.mxu0 0.0
        %1080 = vmatpush.msra.mxu0 0.0
        %1081 = vmatpush.msra.mxu0 0.0
        %1082 = vmatpush.msra.mxu0 0.0
        %1083 = vmatpush.msra.mxu0 0.0
        %1084 = vmatpush.msra.mxu0 0.0
        %1085 = vmatpush.msra.mxu0 0.0
        %1086 = vmatpush.msra.mxu0 0.0
        %1087 = vmatpush.msra.mxu0 %v398
        %1088 = vmatpush.msra.mxu0 %v397
        %1089 = vmatpush.msra.mxu0 %v396
        %1090 = vmatpush.msra.mxu0 %v395
        %1091 = vmatmul.f32.gmra.mxu0 %v963
        %v1092 = vpop.f32.mrf.mxu0
        %v1093 = vadd.f32 0.0, %v1092
        %1094 = vmatmul.f32.gmra.mxu0 %v966
        %v1095 = vpop.f32.mrf.mxu0
        %v1096 = vadd.f32 0.0, %v1095
        %1097 = vmatmul.f32.gmra.mxu0 %v969
        %v1098 = vpop.f32.mrf.mxu0
        %v1099 = vadd.f32 0.0, %v1098
        %1100 = vmatmul.f32.gmra.mxu0 %v972
        %v1101 = vpop.f32.mrf.mxu0
        %v1102 = vadd.f32 0.0, %v1101
        %1103 = vmatmul.f32.gmra.mxu0 %v975
        %v1104 = vpop.f32.mrf.mxu0
        %v1105 = vadd.f32 0.0, %v1104
        %1106 = vmatmul.f32.gmra.mxu0 %v978
        %v1107 = vpop.f32.mrf.mxu0
        %v1108 = vadd.f32 0.0, %v1107
        %1109 = vmatmul.f32.gmra.mxu0 %v981
        %v1110 = vpop.f32.mrf.mxu0
        %v1111 = vadd.f32 0.0, %v1110
        %1112 = vmatmul.f32.gmra.mxu0 %v984
        %v1113 = vpop.f32.mrf.mxu0
        %v1114 = vadd.f32 0.0, %v1113
        %1115 = vmatmul.f32.gmra.mxu0 %v987
        %v1116 = vpop.f32.mrf.mxu0
        %v1117 = vadd.f32 0.0, %v1116
        %1118 = vmatmul.f32.gmra.mxu0 %v990
        %v1119 = vpop.f32.mrf.mxu0
        %v1120 = vadd.f32 0.0, %v1119
        %1121 = vmatmul.f32.gmra.mxu0 %v993
        %v1122 = vpop.f32.mrf.mxu0
        %v1123 = vadd.f32 0.0, %v1122
        %1124 = vmatmul.f32.gmra.mxu0 %v996
        %v1125 = vpop.f32.mrf.mxu0
        %v1126 = vadd.f32 0.0, %v1125
        %1127 = vmatmul.f32.gmra.mxu0 %v999
        %v1128 = vpop.f32.mrf.mxu0
        %v1129 = vadd.f32 0.0, %v1128
        %1130 = vmatmul.f32.gmra.mxu0 %v1002
        %v1131 = vpop.f32.mrf.mxu0
        %v1132 = vadd.f32 0.0, %v1131
        %1133 = vmatmul.f32.gmra.mxu0 %v1005
        %v1134 = vpop.f32.mrf.mxu0
        %v1135 = vadd.f32 0.0, %v1134
        %1136 = vmatmul.f32.gmra.mxu0 %v1008
        %v1137 = vpop.f32.mrf.mxu0
        %v1138 = vadd.f32 0.0, %v1137
        %1139 = vdwg.mxu0
        %1140 = vmatpush.msra.mxu0 0.0
        %1141 = vmatpush.msra.mxu0 0.0
        %1142 = vmatpush.msra.mxu0 0.0
        %1143 = vmatpush.msra.mxu0 0.0
        %1144 = vmatpush.msra.mxu0 0.0
        %1145 = vmatpush.msra.mxu0 0.0
        %1146 = vmatpush.msra.mxu0 0.0
        %1147 = vmatpush.msra.mxu0 0.0
        %1148 = vmatpush.msra.mxu0 0.0
        %1149 = vmatpush.msra.mxu0 0.0
        %1150 = vmatpush.msra.mxu0 0.0
        %1151 = vmatpush.msra.mxu0 0.0
        %1152 = vmatpush.msra.mxu0 %v411
        %1153 = vmatpush.msra.mxu0 %v410
        %1154 = vmatpush.msra.mxu0 %v409
        %1155 = vmatpush.msra.mxu0 %v408
        %1156 = vmatmul.f32.gmra.mxu0 %v963
        %v1157 = vpop.f32.mrf.mxu0
        %v1158 = vadd.f32 0.0, %v1157
        %1159 = vmatmul.f32.gmra.mxu0 %v966
        %v1160 = vpop.f32.mrf.mxu0
        %v1161 = vadd.f32 0.0, %v1160
        %1162 = vmatmul.f32.gmra.mxu0 %v969
        %v1163 = vpop.f32.mrf.mxu0
        %v1164 = vadd.f32 0.0, %v1163
        %1165 = vmatmul.f32.gmra.mxu0 %v972
        %v1166 = vpop.f32.mrf.mxu0
        %v1167 = vadd.f32 0.0, %v1166
        %1168 = vmatmul.f32.gmra.mxu0 %v975
        %v1169 = vpop.f32.mrf.mxu0
        %v1170 = vadd.f32 0.0, %v1169
        %1171 = vmatmul.f32.gmra.mxu0 %v978
        %v1172 = vpop.f32.mrf.mxu0
        %v1173 = vadd.f32 0.0, %v1172
        %1174 = vmatmul.f32.gmra.mxu0 %v981
        %v1175 = vpop.f32.mrf.mxu0
        %v1176 = vadd.f32 0.0, %v1175
        %1177 = vmatmul.f32.gmra.mxu0 %v984
        %v1178 = vpop.f32.mrf.mxu0
        %v1179 = vadd.f32 0.0, %v1178
        %1180 = vmatmul.f32.gmra.mxu0 %v987
        %v1181 = vpop.f32.mrf.mxu0
        %v1182 = vadd.f32 0.0, %v1181
        %1183 = vmatmul.f32.gmra.mxu0 %v990
        %v1184 = vpop.f32.mrf.mxu0
        %v1185 = vadd.f32 0.0, %v1184
        %1186 = vmatmul.f32.gmra.mxu0 %v993
        %v1187 = vpop.f32.mrf.mxu0
        %v1188 = vadd.f32 0.0, %v1187
        %1189 = vmatmul.f32.gmra.mxu0 %v996
        %v1190 = vpop.f32.mrf.mxu0
        %v1191 = vadd.f32 0.0, %v1190
        %1192 = vmatmul.f32.gmra.mxu0 %v999
        %v1193 = vpop.f32.mrf.mxu0
        %v1194 = vadd.f32 0.0, %v1193
        %1195 = vmatmul.f32.gmra.mxu0 %v1002
        %v1196 = vpop.f32.mrf.mxu0
        %v1197 = vadd.f32 0.0, %v1196
        %1198 = vmatmul.f32.gmra.mxu0 %v1005
        %v1199 = vpop.f32.mrf.mxu0
        %v1200 = vadd.f32 0.0, %v1199
        %1201 = vmatmul.f32.gmra.mxu0 %v1008
        %v1202 = vpop.f32.mrf.mxu0
        %v1203 = vadd.f32 0.0, %v1202
        %1204 = vdwg.mxu0
        %v1205 = vld [vmem:[%s5] sm:$0xff]
        %v1206 = vld [vmem:[%s5 + $0x8] sm:$0xff]
        %v1207 = vld [vmem:[%s5 + $0x10] sm:$0xff]
        %v1208 = vld [vmem:[%s5 + $0x18] sm:$0xff]
        %v1209 = vld [vmem:[%s5 + $0x20] sm:$0xff]
        %v1210 = vld [vmem:[%s5 + $0x28] sm:$0xff]
        %v1211 = vld [vmem:[%s5 + $0x30] sm:$0xff]
        %v1212 = vld [vmem:[%s5 + $0x38] sm:$0xff]
        %v1213 = vld [vmem:[%s5 + $0x40] sm:$0xff]
        %v1214 = vld [vmem:[%s5 + $0x48] sm:$0xff]
        %v1215 = vld [vmem:[%s5 + $0x50] sm:$0xff]
        %v1216 = vld [vmem:[%s5 + $0x58] sm:$0xff]
        %v1217 = vld [vmem:[%s5 + $0x60] sm:$0xff]
        %v1218 = vld [vmem:[%s5 + $0x68] sm:$0xff]
        %v1219 = vld [vmem:[%s5 + $0x70] sm:$0xff]
        %v1220 = vld [vmem:[%s5 + $0x78] sm:$0xff]
        %v1221 = vld [vmem:[%s6] sm:$0xff]
        %v1222 = vld [vmem:[%s6 + $0x8] sm:$0xff]
        %v1223 = vld [vmem:[%s6 + $0x10] sm:$0xff]
        %v1224 = vld [vmem:[%s6 + $0x18] sm:$0xff]
        %v1225 = vld [vmem:[%s6 + $0x20] sm:$0xff]
        %v1226 = vld [vmem:[%s6 + $0x28] sm:$0xff]
        %v1227 = vld [vmem:[%s6 + $0x30] sm:$0xff]
        %v1228 = vld [vmem:[%s6 + $0x38] sm:$0xff]
        %v1229 = vld [vmem:[%s6 + $0x40] sm:$0xff]
        %v1230 = vld [vmem:[%s6 + $0x48] sm:$0xff]
        %v1231 = vld [vmem:[%s6 + $0x50] sm:$0xff]
        %v1232 = vld [vmem:[%s6 + $0x58] sm:$0xff]
        %v1233 = vld [vmem:[%s6 + $0x60] sm:$0xff]
        %v1234 = vld [vmem:[%s6 + $0x68] sm:$0xff]
        %v1235 = vld [vmem:[%s6 + $0x70] sm:$0xff]
        %v1236 = vld [vmem:[%s6 + $0x78] sm:$0xff]
        %1237 = vmatpush.msra.mxu0 %v1138
        %1238 = vmatpush.msra.mxu0 %v1135
        %1239 = vmatpush.msra.mxu0 %v1132
        %1240 = vmatpush.msra.mxu0 %v1129
        %1241 = vmatpush.msra.mxu0 %v1126
        %1242 = vmatpush.msra.mxu0 %v1123
        %1243 = vmatpush.msra.mxu0 %v1120
        %1244 = vmatpush.msra.mxu0 %v1117
        %1245 = vmatpush.msra.mxu0 %v1114
        %1246 = vmatpush.msra.mxu0 %v1111
        %1247 = vmatpush.msra.mxu0 %v1108
        %1248 = vmatpush.msra.mxu0 %v1105
        %1249 = vmatpush.msra.mxu0 %v1102
        %1250 = vmatpush.msra.mxu0 %v1099
        %1251 = vmatpush.msra.mxu0 %v1096
        %1252 = vmatpush.msra.mxu0 %v1093
        %1253 = vmatmul.f32.gmra.mxu0 %v1221
        %v1254 = vpop.f32.mrf.mxu0
        %v1255 = vadd.f32 0.0, %v1254
        %1256 = vmatmul.f32.gmra.mxu0 %v1222
        %v1257 = vpop.f32.mrf.mxu0
        %v1258 = vadd.f32 0.0, %v1257
        %1259 = vmatmul.f32.gmra.mxu0 %v1223
        %v1260 = vpop.f32.mrf.mxu0
        %v1261 = vadd.f32 0.0, %v1260
        %1262 = vmatmul.f32.gmra.mxu0 %v1224
        %v1263 = vpop.f32.mrf.mxu0
        %v1264 = vadd.f32 0.0, %v1263
        %1265 = vmatmul.f32.gmra.mxu0 %v1225
        %v1266 = vpop.f32.mrf.mxu0
        %v1267 = vadd.f32 0.0, %v1266
        %1268 = vmatmul.f32.gmra.mxu0 %v1226
        %v1269 = vpop.f32.mrf.mxu0
        %v1270 = vadd.f32 0.0, %v1269
        %1271 = vmatmul.f32.gmra.mxu0 %v1227
        %v1272 = vpop.f32.mrf.mxu0
        %v1273 = vadd.f32 0.0, %v1272
        %1274 = vmatmul.f32.gmra.mxu0 %v1228
        %v1275 = vpop.f32.mrf.mxu0
        %v1276 = vadd.f32 0.0, %v1275
        %1277 = vmatmul.f32.gmra.mxu0 %v1229
        %v1278 = vpop.f32.mrf.mxu0
        %v1279 = vadd.f32 0.0, %v1278
        %1280 = vmatmul.f32.gmra.mxu0 %v1230
        %v1281 = vpop.f32.mrf.mxu0
        %v1282 = vadd.f32 0.0, %v1281
        %1283 = vmatmul.f32.gmra.mxu0 %v1231
        %v1284 = vpop.f32.mrf.mxu0
        %v1285 = vadd.f32 0.0, %v1284
        %1286 = vmatmul.f32.gmra.mxu0 %v1232
        %v1287 = vpop.f32.mrf.mxu0
        %v1288 = vadd.f32 0.0, %v1287
        %1289 = vmatmul.f32.gmra.mxu0 %v1233
        %v1290 = vpop.f32.mrf.mxu0
        %v1291 = vadd.f32 0.0, %v1290
        %1292 = vmatmul.f32.gmra.mxu0 %v1234
        %v1293 = vpop.f32.mrf.mxu0
        %v1294 = vadd.f32 0.0, %v1293
        %1295 = vmatmul.f32.gmra.mxu0 %v1235
        %v1296 = vpop.f32.mrf.mxu0
        %v1297 = vadd.f32 0.0, %v1296
        %1298 = vmatmul.f32.gmra.mxu0 %v1236
        %v1299 = vpop.f32.mrf.mxu0
        %v1300 = vadd.f32 0.0, %v1299
        %1301 = vdwg.mxu0
        %1302 = vmatpush.msra.mxu0 %v1073
        %1303 = vmatpush.msra.mxu0 %v1070
        %1304 = vmatpush.msra.mxu0 %v1067
        %1305 = vmatpush.msra.mxu0 %v1064
        %1306 = vmatpush.msra.mxu0 %v1061
        %1307 = vmatpush.msra.mxu0 %v1058
        %1308 = vmatpush.msra.mxu0 %v1055
        %1309 = vmatpush.msra.mxu0 %v1052
        %1310 = vmatpush.msra.mxu0 %v1049
        %1311 = vmatpush.msra.mxu0 %v1046
        %1312 = vmatpush.msra.mxu0 %v1043
        %1313 = vmatpush.msra.mxu0 %v1040
        %1314 = vmatpush.msra.mxu0 %v1037
        %1315 = vmatpush.msra.mxu0 %v1034
        %1316 = vmatpush.msra.mxu0 %v1031
        %1317 = vmatpush.msra.mxu0 %v1028
        %1318 = vmatmul.f32.gmra.mxu0 %v1205
        %v1319 = vpop.f32.mrf.mxu0
        %v1320 = vadd.f32 %v1255, %v1319
        %1321 = vmatmul.f32.gmra.mxu0 %v1206
        %v1322 = vpop.f32.mrf.mxu0
        %v1323 = vadd.f32 %v1258, %v1322
        %1324 = vmatmul.f32.gmra.mxu0 %v1207
        %v1325 = vpop.f32.mrf.mxu0
        %v1326 = vadd.f32 %v1261, %v1325
        %1327 = vmatmul.f32.gmra.mxu0 %v1208
        %v1328 = vpop.f32.mrf.mxu0
        %v1329 = vadd.f32 %v1264, %v1328
        %1330 = vmatmul.f32.gmra.mxu0 %v1209
        %v1331 = vpop.f32.mrf.mxu0
        %v1332 = vadd.f32 %v1267, %v1331
        %1333 = vmatmul.f32.gmra.mxu0 %v1210
        %v1334 = vpop.f32.mrf.mxu0
        %v1335 = vadd.f32 %v1270, %v1334
        %1336 = vmatmul.f32.gmra.mxu0 %v1211
        %v1337 = vpop.f32.mrf.mxu0
        %v1338 = vadd.f32 %v1273, %v1337
        %1339 = vmatmul.f32.gmra.mxu0 %v1212
        %v1340 = vpop.f32.mrf.mxu0
        %v1341 = vadd.f32 %v1276, %v1340
        %1342 = vmatmul.f32.gmra.mxu0 %v1213
        %v1343 = vpop.f32.mrf.mxu0
        %v1344 = vadd.f32 %v1279, %v1343
        %1345 = vmatmul.f32.gmra.mxu0 %v1214
        %v1346 = vpop.f32.mrf.mxu0
        %v1347 = vadd.f32 %v1282, %v1346
        %1348 = vmatmul.f32.gmra.mxu0 %v1215
        %v1349 = vpop.f32.mrf.mxu0
        %v1350 = vadd.f32 %v1285, %v1349
        %1351 = vmatmul.f32.gmra.mxu0 %v1216
        %v1352 = vpop.f32.mrf.mxu0
        %v1353 = vadd.f32 %v1288, %v1352
        %1354 = vmatmul.f32.gmra.mxu0 %v1217
        %v1355 = vpop.f32.mrf.mxu0
        %v1356 = vadd.f32 %v1291, %v1355
        %1357 = vmatmul.f32.gmra.mxu0 %v1218
        %v1358 = vpop.f32.mrf.mxu0
        %v1359 = vadd.f32 %v1294, %v1358
        %1360 = vmatmul.f32.gmra.mxu0 %v1219
        %v1361 = vpop.f32.mrf.mxu0
        %v1362 = vadd.f32 %v1297, %v1361
        %1363 = vmatmul.f32.gmra.mxu0 %v1220
        %v1364 = vpop.f32.mrf.mxu0
        %v1365 = vadd.f32 %v1300, %v1364
        %1366 = vdwg.mxu0
        %v1367 = vld [vmem:[%s7] sm:$0xff]
        %v1368 = vld [vmem:[%s7 + $0x8] sm:$0xff]
        %v1369 = vld [vmem:[%s7 + $0x10] sm:$0xff]
        %v1370 = vld [vmem:[%s7 + $0x18] sm:$0xff]
        %v1371 = vld [vmem:[%s7 + $0x20] sm:$0xff]
        %v1372 = vld [vmem:[%s7 + $0x28] sm:$0xff]
        %v1373 = vld [vmem:[%s7 + $0x30] sm:$0xff]
        %v1374 = vld [vmem:[%s7 + $0x38] sm:$0xff]
        %v1375 = vld [vmem:[%s7 + $0x40] sm:$0xff]
        %v1376 = vld [vmem:[%s7 + $0x48] sm:$0xff]
        %v1377 = vld [vmem:[%s7 + $0x50] sm:$0xff]
        %v1378 = vld [vmem:[%s7 + $0x58] sm:$0xff]
        %v1379 = vld [vmem:[%s7 + $0x60] sm:$0xff]
        %v1380 = vld [vmem:[%s7 + $0x68] sm:$0xff]
        %v1381 = vld [vmem:[%s7 + $0x70] sm:$0xff]
        %v1382 = vld [vmem:[%s7 + $0x78] sm:$0xff]
        %1383 = vmatpush.msra.mxu0 %v1203
        %1384 = vmatpush.msra.mxu0 %v1200
        %1385 = vmatpush.msra.mxu0 %v1197
        %1386 = vmatpush.msra.mxu0 %v1194
        %1387 = vmatpush.msra.mxu0 %v1191
        %1388 = vmatpush.msra.mxu0 %v1188
        %1389 = vmatpush.msra.mxu0 %v1185
        %1390 = vmatpush.msra.mxu0 %v1182
        %1391 = vmatpush.msra.mxu0 %v1179
        %1392 = vmatpush.msra.mxu0 %v1176
        %1393 = vmatpush.msra.mxu0 %v1173
        %1394 = vmatpush.msra.mxu0 %v1170
        %1395 = vmatpush.msra.mxu0 %v1167
        %1396 = vmatpush.msra.mxu0 %v1164
        %1397 = vmatpush.msra.mxu0 %v1161
        %1398 = vmatpush.msra.mxu0 %v1158
        %1399 = vmatmul.f32.gmra.mxu0 %v1367
        %v1400 = vpop.f32.mrf.mxu0
        %v1401 = vadd.f32 0.0, %v1400
        %1402 = vmatmul.f32.gmra.mxu0 %v1368
        %v1403 = vpop.f32.mrf.mxu0
        %v1404 = vadd.f32 0.0, %v1403
        %1405 = vmatmul.f32.gmra.mxu0 %v1369
        %v1406 = vpop.f32.mrf.mxu0
        %v1407 = vadd.f32 0.0, %v1406
        %1408 = vmatmul.f32.gmra.mxu0 %v1370
        %v1409 = vpop.f32.mrf.mxu0
        %v1410 = vadd.f32 0.0, %v1409
        %1411 = vmatmul.f32.gmra.mxu0 %v1371
        %v1412 = vpop.f32.mrf.mxu0
        %v1413 = vadd.f32 0.0, %v1412
        %1414 = vmatmul.f32.gmra.mxu0 %v1372
        %v1415 = vpop.f32.mrf.mxu0
        %v1416 = vadd.f32 0.0, %v1415
        %1417 = vmatmul.f32.gmra.mxu0 %v1373
        %v1418 = vpop.f32.mrf.mxu0
        %v1419 = vadd.f32 0.0, %v1418
        %1420 = vmatmul.f32.gmra.mxu0 %v1374
        %v1421 = vpop.f32.mrf.mxu0
        %v1422 = vadd.f32 0.0, %v1421
        %1423 = vmatmul.f32.gmra.mxu0 %v1375
        %v1424 = vpop.f32.mrf.mxu0
        %v1425 = vadd.f32 0.0, %v1424
        %1426 = vmatmul.f32.gmra.mxu0 %v1376
        %v1427 = vpop.f32.mrf.mxu0
        %v1428 = vadd.f32 0.0, %v1427
        %1429 = vmatmul.f32.gmra.mxu0 %v1377
        %v1430 = vpop.f32.mrf.mxu0
        %v1431 = vadd.f32 0.0, %v1430
        %1432 = vmatmul.f32.gmra.mxu0 %v1378
        %v1433 = vpop.f32.mrf.mxu0
        %v1434 = vadd.f32 0.0, %v1433
        %1435 = vmatmul.f32.gmra.mxu0 %v1379
        %v1436 = vpop.f32.mrf.mxu0
        %v1437 = vadd.f32 0.0, %v1436
        %1438 = vmatmul.f32.gmra.mxu0 %v1380
        %v1439 = vpop.f32.mrf.mxu0
        %v1440 = vadd.f32 0.0, %v1439
        %1441 = vmatmul.f32.gmra.mxu0 %v1381
        %v1442 = vpop.f32.mrf.mxu0
        %v1443 = vadd.f32 0.0, %v1442
        %1444 = vmatmul.f32.gmra.mxu0 %v1382
        %v1445 = vpop.f32.mrf.mxu0
        %v1446 = vadd.f32 0.0, %v1445
        %1447 = vdwg.mxu0
        %v1448 = vadd.f32 %v1320, %v1401
        %v1449 = vadd.f32 %v1323, %v1404
        %v1450 = vadd.f32 %v1326, %v1407
        %v1451 = vadd.f32 %v1329, %v1410
        %v1452 = vadd.f32 %v1332, %v1413
        %v1453 = vadd.f32 %v1335, %v1416
        %v1454 = vadd.f32 %v1338, %v1419
        %v1455 = vadd.f32 %v1341, %v1422
        %v1456 = vadd.f32 %v1344, %v1425
        %v1457 = vadd.f32 %v1347, %v1428
        %v1458 = vadd.f32 %v1350, %v1431
        %v1459 = vadd.f32 %v1353, %v1434
        %v1460 = vadd.f32 %v1356, %v1437
        %v1461 = vadd.f32 %v1359, %v1440
        %v1462 = vadd.f32 %v1362, %v1443
        %v1463 = vadd.f32 %v1365, %v1446
        %v1464 = vld [vmem:[%s8] sm:$0xff]
        %v1465 = vld [vmem:[%s8 + $0x8] sm:$0xff]
        %v1466 = vld [vmem:[%s8 + $0x10] sm:$0xff]
        %v1467 = vld [vmem:[%s8 + $0x18] sm:$0xff]
        %v1468 = vld [vmem:[%s8 + $0x20] sm:$0xff]
        %v1469 = vld [vmem:[%s8 + $0x28] sm:$0xff]
        %v1470 = vld [vmem:[%s8 + $0x30] sm:$0xff]
        %v1471 = vld [vmem:[%s8 + $0x38] sm:$0xff]
        %v1472 = vld [vmem:[%s8 + $0x40] sm:$0xff]
        %v1473 = vld [vmem:[%s8 + $0x48] sm:$0xff]
        %v1474 = vld [vmem:[%s8 + $0x50] sm:$0xff]
        %v1475 = vld [vmem:[%s8 + $0x58] sm:$0xff]
        %v1476 = vld [vmem:[%s8 + $0x60] sm:$0xff]
        %v1477 = vld [vmem:[%s8 + $0x68] sm:$0xff]
        %v1478 = vld [vmem:[%s8 + $0x70] sm:$0xff]
        %v1479 = vld [vmem:[%s8 + $0x78] sm:$0xff]
        %1481 = vset.pattern.permute.xlu0 0
        %1482 = vperm.xlu0 %1481, %v1464
        %v1483 = vpop.permute.xlu0 %1482
        %1486 = vset.pattern.permute.xlu0 0
        %1487 = vperm.xlu0 %1486, %v1465
        %v1488 = vpop.permute.xlu0 %1487
        %1491 = vset.pattern.permute.xlu0 0
        %1492 = vperm.xlu0 %1491, %v1466
        %v1493 = vpop.permute.xlu0 %1492
        %1496 = vset.pattern.permute.xlu0 0
        %1497 = vperm.xlu0 %1496, %v1467
        %v1498 = vpop.permute.xlu0 %1497
        %1501 = vset.pattern.permute.xlu0 0
        %1502 = vperm.xlu0 %1501, %v1468
        %v1503 = vpop.permute.xlu0 %1502
        %1506 = vset.pattern.permute.xlu0 0
        %1507 = vperm.xlu0 %1506, %v1469
        %v1508 = vpop.permute.xlu0 %1507
        %1511 = vset.pattern.permute.xlu0 0
        %1512 = vperm.xlu0 %1511, %v1470
        %v1513 = vpop.permute.xlu0 %1512
        %1516 = vset.pattern.permute.xlu0 0
        %1517 = vperm.xlu0 %1516, %v1471
        %v1518 = vpop.permute.xlu0 %1517
        %1521 = vset.pattern.permute.xlu0 0
        %1522 = vperm.xlu0 %1521, %v1472
        %v1523 = vpop.permute.xlu0 %1522
        %1526 = vset.pattern.permute.xlu0 0
        %1527 = vperm.xlu0 %1526, %v1473
        %v1528 = vpop.permute.xlu0 %1527
        %1531 = vset.pattern.permute.xlu0 0
        %1532 = vperm.xlu0 %1531, %v1474
        %v1533 = vpop.permute.xlu0 %1532
        %1536 = vset.pattern.permute.xlu0 0
        %1537 = vperm.xlu0 %1536, %v1475
        %v1538 = vpop.permute.xlu0 %1537
        %1541 = vset.pattern.permute.xlu0 0
        %1542 = vperm.xlu0 %1541, %v1476
        %v1543 = vpop.permute.xlu0 %1542
        %1546 = vset.pattern.permute.xlu0 0
        %1547 = vperm.xlu0 %1546, %v1477
        %v1548 = vpop.permute.xlu0 %1547
        %1551 = vset.pattern.permute.xlu0 0
        %1552 = vperm.xlu0 %1551, %v1478
        %v1553 = vpop.permute.xlu0 %1552
        %1556 = vset.pattern.permute.xlu0 0
        %1557 = vperm.xlu0 %1556, %v1479
        %v1558 = vpop.permute.xlu0 %1557
        %v1560 = vadd.f32 %v1448, %v1483
        %v1561 = vadd.f32 %v1449, %v1488
        %v1562 = vadd.f32 %v1450, %v1493
        %v1563 = vadd.f32 %v1451, %v1498
        %v1564 = vadd.f32 %v1452, %v1503
        %v1565 = vadd.f32 %v1453, %v1508
        %v1566 = vadd.f32 %v1454, %v1513
        %v1567 = vadd.f32 %v1455, %v1518
        %v1568 = vadd.f32 %v1456, %v1523
        %v1569 = vadd.f32 %v1457, %v1528
        %v1570 = vadd.f32 %v1458, %v1533
        %v1571 = vadd.f32 %v1459, %v1538
        %v1572 = vadd.f32 %v1460, %v1543
        %v1573 = vadd.f32 %v1461, %v1548
        %v1574 = vadd.f32 %v1462, %v1553
        %v1575 = vadd.f32 %v1463, %v1558
        %vm1576 = vcmp.ge.f32.partialorder %v1560, 0.0
        %vm1577 = vcmp.ge.f32.partialorder %v1561, 0.0
        %vm1578 = vcmp.ge.f32.partialorder %v1562, 0.0
        %vm1579 = vcmp.ge.f32.partialorder %v1563, 0.0
        %vm1580 = vcmp.ge.f32.partialorder %v1564, 0.0
        %vm1581 = vcmp.ge.f32.partialorder %v1565, 0.0
        %vm1582 = vcmp.ge.f32.partialorder %v1566, 0.0
        %vm1583 = vcmp.ge.f32.partialorder %v1567, 0.0
        %vm1584 = vcmp.ge.f32.partialorder %v1568, 0.0
        %vm1585 = vcmp.ge.f32.partialorder %v1569, 0.0
        %vm1586 = vcmp.ge.f32.partialorder %v1570, 0.0
        %vm1587 = vcmp.ge.f32.partialorder %v1571, 0.0
        %vm1588 = vcmp.ge.f32.partialorder %v1572, 0.0
        %vm1589 = vcmp.ge.f32.partialorder %v1573, 0.0
        %vm1590 = vcmp.ge.f32.partialorder %v1574, 0.0
        %vm1591 = vcmp.ge.f32.partialorder %v1575, 0.0
        %v1592 = vmul.f32 %v1560, 0.01
        %v1593 = vmul.f32 %v1561, 0.01
        %v1594 = vmul.f32 %v1562, 0.01
        %v1595 = vmul.f32 %v1563, 0.01
        %v1596 = vmul.f32 %v1564, 0.01
        %v1597 = vmul.f32 %v1565, 0.01
        %v1598 = vmul.f32 %v1566, 0.01
        %v1599 = vmul.f32 %v1567, 0.01
        %v1600 = vmul.f32 %v1568, 0.01
        %v1601 = vmul.f32 %v1569, 0.01
        %v1602 = vmul.f32 %v1570, 0.01
        %v1603 = vmul.f32 %v1571, 0.01
        %v1604 = vmul.f32 %v1572, 0.01
        %v1605 = vmul.f32 %v1573, 0.01
        %v1606 = vmul.f32 %v1574, 0.01
        %v1607 = vmul.f32 %v1575, 0.01
        %v1608 = vsel %vm1576, %v1560, %v1592
        %v1609 = vsel %vm1577, %v1561, %v1593
        %v1610 = vsel %vm1578, %v1562, %v1594
        %v1611 = vsel %vm1579, %v1563, %v1595
        %v1612 = vsel %vm1580, %v1564, %v1596
        %v1613 = vsel %vm1581, %v1565, %v1597
        %v1614 = vsel %vm1582, %v1566, %v1598
        %v1615 = vsel %vm1583, %v1567, %v1599
        %v1616 = vsel %vm1584, %v1568, %v1600
        %v1617 = vsel %vm1585, %v1569, %v1601
        %v1618 = vsel %vm1586, %v1570, %v1602
        %v1619 = vsel %vm1587, %v1571, %v1603
        %v1620 = vsel %vm1588, %v1572, %v1604
        %v1621 = vsel %vm1589, %v1573, %v1605
        %v1622 = vsel %vm1590, %v1574, %v1606
        %v1623 = vsel %vm1591, %v1575, %v1607
        %1624 = vst.msk [vmem:[%s340] sm:$0xff] %vm961, %v1608
        %1625 = vst.msk [vmem:[%s340 + $0x8] sm:$0xff] %vm961, %v1609
        %1626 = vst.msk [vmem:[%s340 + $0x10] sm:$0xff] %vm961, %v1610
        %1627 = vst.msk [vmem:[%s340 + $0x18] sm:$0xff] %vm961, %v1611
        %1628 = vst.msk [vmem:[%s340 + $0x20] sm:$0xff] %vm961, %v1612
        %1629 = vst.msk [vmem:[%s340 + $0x28] sm:$0xff] %vm961, %v1613
        %1630 = vst.msk [vmem:[%s340 + $0x30] sm:$0xff] %vm961, %v1614
        %1631 = vst.msk [vmem:[%s340 + $0x38] sm:$0xff] %vm961, %v1615
        %1632 = vst.msk [vmem:[%s340 + $0x40] sm:$0xff] %vm961, %v1616
        %1633 = vst.msk [vmem:[%s340 + $0x48] sm:$0xff] %vm961, %v1617
        %1634 = vst.msk [vmem:[%s340 + $0x50] sm:$0xff] %vm961, %v1618
        %1635 = vst.msk [vmem:[%s340 + $0x58] sm:$0xff] %vm961, %v1619
        %1636 = vst.msk [vmem:[%s340 + $0x60] sm:$0xff] %vm961, %v1620
        %1637 = vst.msk [vmem:[%s340 + $0x68] sm:$0xff] %vm961, %v1621
        %1638 = vst.msk [vmem:[%s340 + $0x70] sm:$0xff] %vm961, %v1622
        %1639 = vst.msk [vmem:[%s340 + $0x78] sm:$0xff] %vm961, %v1623
        %s1640 = sand.u32 %s230, 1
        %s1641 = scalar_lea.sflag [#allocation3], %s1640
        %s1642 = sand.u32 %s230, 1
        %s1643 = smul.addr %s1642, 128
        %s1644 = scalar_lea.vmem [#allocation2], %s1643
        // Predicated region
        $region57: #{conv_up.1} parent=55 // pred_check
          %p1645 = pneg %p240
        $region58: #{conv_up.1} parent=55 // pred_check_branch
          %1647 = sbr.rel (%p1645) target = $region60
        $region59: #{conv_up.1} parent=55 // pred_region
          %1649 = vsyncadd %s1641, 0
          %s1650 = smul.addr %s23, 16
          %s1651 = smul.addr %s1650, 8
          %s1652 = scalar_lea.hbm %s9, %s1651
          %s1653 = sshll.u32 %s1644, 4
          %s1654 = int_to_ptr.vmem [resolvable:$true] %s1653
          %s1655 = sshll.u32 %s1652, 4
          %s1656 = int_to_ptr.hbm [resolvable:$true] %s1655
          %1661 = dma.vmem_to_hbm [thread:$0]  %s1654, 2048, %s1656, %s1641, 128, 128, 8
        $region60: #{conv_up.1} parent=55 // pred_fallthru
          _
      $region56: #{conv_up.1} parent=5 // pred_fallthru
        _
      %p1662 = scmp.le.s32.totalorder 2, %s18
      // Predicated region
      $region61: #{conv_up.1} parent=5 // pred_check
        %p1663 = pneg %p1662
      $region62: #{conv_up.1} parent=5 // pred_check_branch
        %1665 = sbr.rel (%p1663) target = $region64
      $region63: #{conv_up.1} parent=5 // pred_region
        %s1666 = ssub.s32 %s18, 2
        // Predicated region
        $region65: #{conv_up.1} parent=63 // pred_check
          %p1667 = pneg %p246
        $region66: #{conv_up.1} parent=63 // pred_check_branch
          %1669 = sbr.rel (%p1667) target = $region68
        $region67: #{conv_up.1} parent=63 // pred_region
          %s1670 = sand.u32 %s231, 1
          %s1671 = scalar_lea.sflag [#allocation3], %s1670
          %s1672 = sand.u32 %s231, 1
          %s1673 = smul.addr %s1672, 128
          %s1674 = scalar_lea.vmem [#allocation2], %s1673
          %1676 = dma.done %s1671, 2048
        $region68: #{conv_up.1} parent=63 // pred_fallthru
          _
      $region64: #{conv_up.1} parent=5 // pred_fallthru
        _
    $region6: #{conv_up.1} parent=1 // loop_footer
      %s22 = sadd.s32 1, %s18
    $region7: #{conv_up.1} parent=1 // loop_footer_branch
      %17 = sbr.rel target = $region3
    $region8: #{conv_up.1} parent=1 // loop_exit
      _
    %1677 = vsyncpa [#allocation3], 1
    %s1678 = scalar_lea.sflag [#allocation3], 1
    %1679 = vsyncpa %s1678, 1

</llo_original>
